<compile_context>
chip_gen: v7x
topology: tpu7x:2x2x1
jax: 0.10.0
libtpu: 0.0.40
codegen_flags: <defaults>
</compile_context>

<pallas_src>
import functools

import jax
import jax.numpy as jnp
from jax.experimental import pallas as pl
from jax.experimental.pallas import tpu as pltpu


# ------------------------------ Pallas kernel ------------------------------ #

def _fused_encoder_kernel(x_ref, cw_ref, cb_ref, pw_ref, pb_ref, o_ref, *, HW):
    """Fused conv-stem + GAP + projection + L2-norm for one tile of images.

    x_ref : (tmi*HW, Kp) bf16  lane-dense im2col tile (Kp = 9*C padded to 128)
    cw_ref: (Kp, C1)     bf16  packed 3x3 conv weight (zero-padded rows)
    cb_ref: (1, C1)      f32   conv bias
    pw_ref: (C1, D)      bf16  projection weight
    pb_ref: (1, D)       f32   projection bias
    o_ref : (tmi, D)     f32   L2-normalized embeddings
    """
    rows = x_ref.shape[0]
    tmi = rows // HW
    C1 = cw_ref.shape[-1]

    # 3x3 conv as a single fused MXU matmul (bf16 operands, f32 accumulation).
    acc = jnp.dot(x_ref[...], cw_ref[...], preferred_element_type=jnp.float32)

    # Bias + ReLU in f32 (safe on v5e: no bf16 VPU math).
    feat = jnp.maximum(acc + cb_ref[...], 0.0)                    # (rows, C1)

    # Global average pool, fused (feature map never leaves VMEM).
    pooled = jnp.sum(feat.reshape(tmi, HW, C1), axis=1) * (1.0 / HW)  # (tmi, C1)

    # Linear projection head (bf16 operands, f32 accumulation) + bias.
    proj = jnp.dot(pooled.astype(pw_ref.dtype), pw_ref[...],
                   preferred_element_type=jnp.float32) + pb_ref[...]

    # L2 normalize, matching torch.nn.functional.normalize: x / max(||x||, eps),
    # expressed as x * rsqrt(max(||x||^2, eps^2)) so sqrt+divide go to the EUP.
    ss = jnp.sum(proj * proj, axis=-1, keepdims=True)
    o_ref[...] = (proj * jax.lax.rsqrt(jnp.maximum(ss, 1e-24))).astype(o_ref.dtype)


# ------------------------------ JAX wrapper --------------------------------- #

def contrastive_random_walk_forward(video, params, *, tmi=32):
    """Forward pass: (B, T, N, H, W, C) -> (B, T, N, output_dim)."""
    B, T, N, H, W, C = video.shape
    M = B * T * N
    C1 = params["conv_w"].shape[-1]
    D = params["proj_w"].shape[-1]
    HW = H * W

    # Keep >= 2 grid steps whenever possible (both v7x TensorCores get work),
    # and pad the image count to a multiple of the tile (padded images are
    # sliced off after the kernel).
    tmi = int(max(1, min(tmi, pl.cdiv(M, 2))))
    Mp = pl.cdiv(M, tmi) * tmi

    # --- lane-dense im2col in the wrapper (one bulk bf16 cast) -------------- #
    K = 9 * C
    Kp = pl.cdiv(K, 128) * 128          # pad contraction to full lane width
    x = video.reshape(M, H, W, C).astype(jnp.float32)
    xp = jnp.pad(x, ((0, Mp - M), (1, 1), (1, 1), (0, 0)))   # halo + M tail
    taps = [xp[:, dy:dy + H, dx:dx + W, :]
            for dy in range(3) for dx in range(3)]
    col = jnp.concatenate(taps, axis=-1)                      # (Mp, H, W, 9C)
    col = jnp.pad(col, ((0, 0), (0, 0), (0, 0), (0, Kp - K)))
    col = col.astype(jnp.bfloat16).reshape(Mp * HW, Kp)       # lane-dense LHS

    # --- pack weights once (resident across grid steps) --------------------- #
    cw = params["conv_w"].reshape(K, C1)
    cw = jnp.pad(cw, ((0, Kp - K), (0, 0))).astype(jnp.bfloat16)   # (Kp, C1)
    cb = params["conv_b"].reshape(1, C1).astype(jnp.float32)
    pw = params["proj_w"].astype(jnp.bfloat16)
    pb = params["proj_b"].reshape(1, D).astype(jnp.float32)

    kernel = functools.partial(_fused_encoder_kernel, HW=HW)

    out = pl.pallas_call(
        kernel,
        out_shape=jax.ShapeDtypeStruct((Mp, D), jnp.float32),
        grid_spec=pltpu.PrefetchScalarGridSpec(
            num_scalar_prefetch=0,
            grid=(Mp // tmi,),
            in_specs=[
                pl.BlockSpec((tmi * HW, Kp), lambda i: (i, 0)),
                pl.BlockSpec((Kp, C1), lambda i: (0, 0)),
                pl.BlockSpec((1, C1), lambda i: (0, 0)),
                pl.BlockSpec((C1, D), lambda i: (0, 0)),
                pl.BlockSpec((1, D), lambda i: (0, 0)),
            ],
            out_specs=pl.BlockSpec((tmi, D), lambda i: (i, 0)),
        ),
        compiler_params=pltpu.CompilerParams(
            dimension_semantics=("parallel",),
            vmem_limit_bytes=48 * 1024 * 1024),
    )(col, cw, cb, pw, pb)

    return out[:M].reshape(B, T, N, D)


# --------------------------- pure-JAX reference ------------------------------ #

def _reference_forward(video, params):
    B, T, N, H, W, C = video.shape
    x = video.reshape(-1, H, W, C).astype(jnp.float32)
    xp = jnp.pad(x, ((0, 0), (1, 1), (1, 1), (0, 0)))
    out = jax.lax.conv_general_dilated(
        xp, params["conv_w"].astype(jnp.float32), (1, 1), "VALID",
        dimension_numbers=("NHWC", "HWIO", "NHWC"))
    feat = jax.nn.relu(out + params["conv_b"])
    pooled = feat.mean(axis=(1, 2))
    proj = pooled @ params["proj_w"] + params["proj_b"]
    nrm = jnp.sqrt(jnp.sum(proj * proj, axis=-1, keepdims=True))
    emb = proj / jnp.maximum(nrm, 1e-12)
    return emb.reshape(B, T, N, -1)


# --------------------------------- main -------------------------------------- #

if __name__ == "__main__":
    key = jax.random.PRNGKey(0)
    k_video, k_cw, k_cb, k_pw, k_pb = jax.random.split(key, 5)

    # Small shapes consistent with the module's (B, T, N, H, W, C) contract.
    B, T, N, H, W, C = 2, 2, 4, 16, 16, 3
    C1, D = 128, 128          # stem width (lane-dense), output_dim

    video = jax.random.normal(k_video, (B, T, N, H, W, C), dtype=jnp.float32)

    # Deterministic synthetic parameters (shapes follow the encoder structure).
    params = {
        "conv_w": 0.1 * jax.random.normal(k_cw, (3, 3, C, C1), dtype=jnp.float32),
        "conv_b": 0.01 * jax.random.normal(k_cb, (C1,), dtype=jnp.float32),
        "proj_w": 0.1 * jax.random.normal(k_pw, (C1, D), dtype=jnp.float32),
        "proj_b": 0.01 * jax.random.normal(k_pb, (D,), dtype=jnp.float32),
    }

    out = contrastive_random_walk_forward(video, params)
    out = jax.block_until_ready(out)
    assert out.shape == (B, T, N, D), out.shape
    assert out.dtype == jnp.float32
    assert bool(jnp.all(jnp.isfinite(out)))

    # Loose tolerance: kernel uses bf16 MXU operands (documented precision drop).
    ref = jax.block_until_ready(_reference_forward(video, params))
    max_err = float(jnp.max(jnp.abs(out - ref)))
    assert max_err < 5e-2, f"max abs err {max_err}"

    print("KERNEL_OK")
</pallas_src>

<mosaic_0001>
module attributes {stable_mosaic.version = 11 : i64} {
  func.func @_fused_encoder_kernel(%arg0: i32, %arg1: memref<2048x128xbf16, #tpu.memory_space<vmem>>, %arg2: memref<128x128xbf16, #tpu.memory_space<vmem>>, %arg3: memref<1x128xf32, #tpu.memory_space<vmem>>, %arg4: memref<128x128xbf16, #tpu.memory_space<vmem>>, %arg5: memref<1x128xf32, #tpu.memory_space<vmem>>, %arg6: memref<8x128xf32, #tpu.memory_space<vmem>>) attributes {dimension_semantics = [#tpu.dimension_semantics<parallel>], iteration_bounds = array<i64: 2>, scalar_prefetch = 0 : i64, scratch_operands = 0 : i64, tpu.core_type = #tpu.core_type<tc>, window_params = [{transform_indices = @transform_0, window_bounds = array<i64: 2048, 128>}, {pipeline_mode = #tpu.pipeline_mode<synchronous>, transform_indices = @transform_1, window_bounds = array<i64: 128, 128>}, {pipeline_mode = #tpu.pipeline_mode<synchronous>, transform_indices = @transform_2, window_bounds = array<i64: 1, 128>}, {pipeline_mode = #tpu.pipeline_mode<synchronous>, transform_indices = @transform_3, window_bounds = array<i64: 128, 128>}, {pipeline_mode = #tpu.pipeline_mode<synchronous>, transform_indices = @transform_4, window_bounds = array<i64: 1, 128>}, {transform_indices = @transform_5, window_bounds = array<i64: 8, 128>}]} {
    %c0 = arith.constant 0 : index
    %c0_0 = arith.constant 0 : index
    %0 = vector.load %arg1[%c0, %c0_0] : memref<2048x128xbf16, #tpu.memory_space<vmem>>, vector<2048x128xbf16>
    %c0_1 = arith.constant 0 : index
    %c0_2 = arith.constant 0 : index
    %1 = vector.load %arg2[%c0_1, %c0_2] : memref<128x128xbf16, #tpu.memory_space<vmem>>, vector<128x128xbf16>
    %cst = arith.constant dense<0.000000e+00> : vector<2048x128xf32>
    %2 = tpu.matmul %0, %1, %cst {dimension_numbers = #tpu.dot_dimension_numbers<[1], [0], [0], [1], [0, 0, 1, 1], [], []>} : vector<2048x128xbf16>, vector<128x128xbf16>, vector<2048x128xf32> -> vector<2048x128xf32>
    %c0_3 = arith.constant 0 : index
    %c0_4 = arith.constant 0 : index
    %3 = vector.load %arg3[%c0_3, %c0_4] : memref<1x128xf32, #tpu.memory_space<vmem>>, vector<1x128xf32>
    %4 = vector.broadcast %3 : vector<1x128xf32> to vector<2048x128xf32>
    %5 = arith.addf %2, %4 : vector<2048x128xf32>
    %cst_5 = arith.constant 0.000000e+00 : f32
    %6 = vector.broadcast %cst_5 : f32 to vector<2048x128xf32>
    %7 = arith.maximumf %5, %6 : vector<2048x128xf32>
    %8 = vector.shape_cast %7 : vector<2048x128xf32> to vector<8x256x128xf32>
    %cst_6 = arith.constant dense<0.000000e+00> : vector<8x128xf32>
    %9 = vector.multi_reduction <add>, %8, %cst_6 [1] : vector<8x256x128xf32> to vector<8x128xf32>
    %cst_7 = arith.constant 3.906250e-03 : f32
    %10 = vector.broadcast %cst_7 : f32 to vector<8x128xf32>
    %11 = arith.mulf %9, %10 : vector<8x128xf32>
    %12 = arith.truncf %11 : vector<8x128xf32> to vector<8x128xbf16>
    %c0_8 = arith.constant 0 : index
    %c0_9 = arith.constant 0 : index
    %13 = vector.load %arg4[%c0_8, %c0_9] : memref<128x128xbf16, #tpu.memory_space<vmem>>, vector<128x128xbf16>
    %cst_10 = arith.constant dense<0.000000e+00> : vector<8x128xf32>
    %14 = tpu.matmul %12, %13, %cst_10 {dimension_numbers = #tpu.dot_dimension_numbers<[1], [0], [0], [1], [0, 0, 1, 1], [], []>} : vector<8x128xbf16>, vector<128x128xbf16>, vector<8x128xf32> -> vector<8x128xf32>
    %c0_11 = arith.constant 0 : index
    %c0_12 = arith.constant 0 : index
    %15 = vector.load %arg5[%c0_11, %c0_12] : memref<1x128xf32, #tpu.memory_space<vmem>>, vector<1x128xf32>
    %16 = vector.broadcast %15 : vector<1x128xf32> to vector<8x128xf32>
    %17 = arith.addf %14, %16 : vector<8x128xf32>
    %18 = arith.mulf %17, %17 : vector<8x128xf32>
    %cst_13 = arith.constant dense<0.000000e+00> : vector<8xf32>
    %19 = vector.multi_reduction <add>, %18, %cst_13 [1] : vector<8x128xf32> to vector<8xf32>
    %20 = vector.shape_cast %19 : vector<8xf32> to vector<8x1xf32>
    %cst_14 = arith.constant 1.000000e-24 : f32
    %21 = vector.broadcast %cst_14 : f32 to vector<8x1xf32>
    %22 = arith.maximumf %20, %21 : vector<8x1xf32>
    %23 = math.rsqrt %22 : vector<8x1xf32>
    %24 = vector.broadcast %23 : vector<8x1xf32> to vector<8x128xf32>
    %25 = arith.mulf %17, %24 : vector<8x128xf32>
    %c0_15 = arith.constant 0 : index
    %c0_16 = arith.constant 0 : index
    %26 = vector.load %arg6[%c0_15, %c0_16] : memref<8x128xf32, #tpu.memory_space<vmem>>, vector<8x128xf32>
    tpu.vector_store %arg6[%c0_15, %c0_16], %25 {strides = array<i32>} : memref<8x128xf32, #tpu.memory_space<vmem>>, vector<8x128xf32>,
    return
  }
  func.func @transform_0(%arg0: i32) -> (i32, i32) {
    %c0_i32 = arith.constant 0 : i32
    %c0_i32_0 = arith.constant 0 : i32
    return %arg0, %c0_i32 : i32, i32
  }
  func.func @transform_1(%arg0: i32) -> (i32, i32) {
    %c0_i32 = arith.constant 0 : i32
    %c0_i32_0 = arith.constant 0 : i32
    %c0_i32_1 = arith.constant 0 : i32
    return %c0_i32, %c0_i32_0 : i32, i32
  }
  func.func @transform_2(%arg0: i32) -> (i32, i32) {
    %c0_i32 = arith.constant 0 : i32
    %c0_i32_0 = arith.constant 0 : i32
    %c0_i32_1 = arith.constant 0 : i32
    return %c0_i32, %c0_i32_0 : i32, i32
  }
  func.func @transform_3(%arg0: i32) -> (i32, i32) {
    %c0_i32 = arith.constant 0 : i32
    %c0_i32_0 = arith.constant 0 : i32
    %c0_i32_1 = arith.constant 0 : i32
    return %c0_i32, %c0_i32_0 : i32, i32
  }
  func.func @transform_4(%arg0: i32) -> (i32, i32) {
    %c0_i32 = arith.constant 0 : i32
    %c0_i32_0 = arith.constant 0 : i32
    %c0_i32_1 = arith.constant 0 : i32
    return %c0_i32, %c0_i32_0 : i32, i32
  }
  func.func @transform_5(%arg0: i32) -> (i32, i32) {
    %c0_i32 = arith.constant 0 : i32
    %c0_i32_0 = arith.constant 0 : i32
    return %arg0, %c0_i32 : i32, i32
  }
}

</mosaic_0001>

<llo_original>
// kernel: tpu_custom_call.1
$region0: #{tpu_custom_call.1}
  #allocation0 [shape = 'u32[]', space=smem, size = 0x4, offset = 0x4, fixed_abs, tag = 'smem constant byte address 0x4 - core index']
  #allocation1 [shape = 'u32[144,128]{1,0:T(1,128)}', space=vmem, size = 0x12000, scoped, tag = 'internal scratch']
  %s0 = inlined_call_operand.hbm [shape: bf16[4096,128], index: 0, kind: input, shape index: {}]
  %s1 = inlined_call_operand.hbm [shape: bf16[128,128], index: 1, kind: input, shape index: {}]
  %s2 = inlined_call_operand.vmem [shape: f32[1,128], index: 2, kind: input, shape index: {}]
  %s3 = inlined_call_operand.hbm [shape: bf16[128,128], index: 3, kind: input, shape index: {}]
  %s4 = inlined_call_operand.vmem [shape: f32[1,128], index: 4, kind: input, shape index: {}]
  %s5 = inlined_call_operand.hbm [shape: f32[16,128], index: 5, kind: output, shape index: {}]
  %s6 = sld [smem:[#allocation0]]
  $region65: #{tpu_custom_call.1} parent=0
    _
  %s8 = ssub.s32 1, %s6
  %s9 = scalar_select 0, %s8, %s6
  $region1: #{tpu_custom_call.1} parent=0
    #allocation2 [shape = 'u8[1048576]{0}', space=vmem, size = 0x100000, scoped, tag = 'input window, operand 0']
    #allocation3 [shape = 's32[2]{0}', space=sflag, size = 0x8, scoped, tag = 'scoped memory for tpu_custom_call.1']
    #allocation4 [shape = 's32[2]{0}', space=sflag, size = 0x8, scoped, tag = 'scoped memory for tpu_custom_call.1']
    #allocation5 [shape = 'u8[32768]{0}', space=vmem, size = 0x8000, scoped, tag = 'input window, operand 1, single buffered']
    #allocation6 [shape = 's32[1]{0}', space=sflag, size = 0x4, scoped, tag = 'scoped memory for tpu_custom_call.1']
    #allocation7 [shape = 'u8[32768]{0}', space=vmem, size = 0x8000, scoped, tag = 'input window, operand 3, single buffered']
    #allocation8 [shape = 'u8[8192]{0}', space=vmem, size = 0x2000, scoped, tag = 'output window, operand 0']
    %10 = vsyncpa [#allocation3], 0
    %s11 = scalar_lea.sflag [#allocation3], 1
    %12 = vsyncpa %s11, 0
    %13 = vsyncpa [#allocation6], 0
    %14 = vsyncpa [#allocation4], 0
    %s15 = scalar_lea.sflag [#allocation4], 1
    %16 = vsyncpa %s15, 0
    loop: start=0, step=1, limit=4
    $region2: #{tpu_custom_call.1} parent=1 // loop_pre_header
      _
    $region3: #{tpu_custom_call.1} parent=1 // loop_header
      %s18 = sphi 0, %s22
      %p19 = scmp.ge.s32.totalorder %s18, 4
      %s28 = sphi 0, %s30
      %s31 = sphi 0, %s28
      %s32 = sphi 0, %s31
      %s48 = sphi 0, %s32
      %s52 = sphi 0, %s52
      %s54 = sphi 0, %s52
      %s55 = sphi 0, %s54
      %s69 = sphi 0, %s55
      %s73 = sphi 0, %s73
      %s75 = sphi 0, %s73
      %s76 = sphi 0, %s75
      %s90 = sphi 0, %s76
      %s94 = sphi 0, %s94
      %s96 = sphi 0, %s94
      %s97 = sphi 0, %s96
      %s111 = sphi 0, %s97
      %s115 = sphi 0, %s115
      %s117 = sphi 0, %s115
      %s118 = sphi 0, %s117
      %s132 = sphi 0, %s118
      %s138 = sphi 0, %s140
      %s141 = sphi 0, %s138
      %s142 = sphi 0, %s141
      %s158 = sphi 0, %s142
    $region4: #{tpu_custom_call.1} parent=1 // loop_header_branch
      %21 = sbr.rel (%p19) target = $region8
    $region5: #{tpu_custom_call.1} parent=1 // loop_body
      %s23 = ssub.s32 %s18, 1
      %s24 = ssub.s32 %s18, 2
      %s25 = sadd.s32 %s18, 1
      %s26 = ssub.s32 %s18, %s25
      %p27 = scmp.eq.s32.totalorder %s26, 0
      %s29 = sadd.s32 %s28, 1
      %s30 = scalar_select %p27, %s28, %s29
      %p33 = pneg %p27
      %p34 = scmp.eq.s32.totalorder %s18, 1
      %p35 = por %p33, %p34
      %p36 = scmp.ne.s32.totalorder %s28, %s31
      %p37 = scmp.eq.s32.totalorder %s18, 0
      %p38 = por %p36, %p37
      %p39 = scmp.ne.s32.totalorder %s28, %s31
      %p40 = scmp.eq.s32.totalorder %s23, 1
      %p41 = por %p39, %p40
      %p42 = scmp.ne.s32.totalorder %s31, %s32
      %p43 = scmp.eq.s32.totalorder %s23, 0
      %p44 = por %p42, %p43
      %p45 = scmp.ne.s32.totalorder %s31, %s32
      %p46 = scmp.eq.s32.totalorder %s24, 1
      %p47 = por %p45, %p46
      %p49 = scmp.ne.s32.totalorder %s32, %s48
      %p50 = scmp.eq.s32.totalorder %s24, 0
      %p51 = por %p49, %p50
      %s53 = sadd.s32 %s52, 1
      %p56 = scmp.eq.s32.totalorder %s18, 1
      %p57 = scmp.ne.s32.totalorder %s52, %s54
      %p58 = scmp.eq.s32.totalorder %s18, 0
      %p59 = por %p57, %p58
      %p60 = scmp.ne.s32.totalorder %s52, %s54
      %p61 = scmp.eq.s32.totalorder %s23, 1
      %p62 = por %p60, %p61
      %p63 = scmp.ne.s32.totalorder %s54, %s55
      %p64 = scmp.eq.s32.totalorder %s23, 0
      %p65 = por %p63, %p64
      %p66 = scmp.ne.s32.totalorder %s54, %s55
      %p67 = scmp.eq.s32.totalorder %s24, 1
      %p68 = por %p66, %p67
      %p70 = scmp.ne.s32.totalorder %s55, %s69
      %p71 = scmp.eq.s32.totalorder %s24, 0
      %p72 = por %p70, %p71
      %s74 = sadd.s32 %s73, 1
      %p77 = scmp.eq.s32.totalorder %s18, 1
      %p78 = scmp.ne.s32.totalorder %s73, %s75
      %p79 = scmp.eq.s32.totalorder %s18, 0
      %p80 = por %p78, %p79
      %p81 = scmp.ne.s32.totalorder %s73, %s75
      %p82 = scmp.eq.s32.totalorder %s23, 1
      %p83 = por %p81, %p82
      %p84 = scmp.ne.s32.totalorder %s75, %s76
      %p85 = scmp.eq.s32.totalorder %s23, 0
      %p86 = por %p84, %p85
      %p87 = scmp.ne.s32.totalorder %s75, %s76
      %p88 = scmp.eq.s32.totalorder %s24, 1
      %p89 = por %p87, %p88
      %p91 = scmp.ne.s32.totalorder %s76, %s90
      %p92 = scmp.eq.s32.totalorder %s24, 0
      %p93 = por %p91, %p92
      %s95 = sadd.s32 %s94, 1
      %p98 = scmp.eq.s32.totalorder %s18, 1
      %p99 = scmp.ne.s32.totalorder %s94, %s96
      %p100 = scmp.eq.s32.totalorder %s18, 0
      %p101 = por %p99, %p100
      %p102 = scmp.ne.s32.totalorder %s94, %s96
      %p103 = scmp.eq.s32.totalorder %s23, 1
      %p104 = por %p102, %p103
      %p105 = scmp.ne.s32.totalorder %s96, %s97
      %p106 = scmp.eq.s32.totalorder %s23, 0
      %p107 = por %p105, %p106
      %p108 = scmp.ne.s32.totalorder %s96, %s97
      %p109 = scmp.eq.s32.totalorder %s24, 1
      %p110 = por %p108, %p109
      %p112 = scmp.ne.s32.totalorder %s97, %s111
      %p113 = scmp.eq.s32.totalorder %s24, 0
      %p114 = por %p112, %p113
      %s116 = sadd.s32 %s115, 1
      %p119 = scmp.eq.s32.totalorder %s18, 1
      %p120 = scmp.ne.s32.totalorder %s115, %s117
      %p121 = scmp.eq.s32.totalorder %s18, 0
      %p122 = por %p120, %p121
      %p123 = scmp.ne.s32.totalorder %s115, %s117
      %p124 = scmp.eq.s32.totalorder %s23, 1
      %p125 = por %p123, %p124
      %p126 = scmp.ne.s32.totalorder %s117, %s118
      %p127 = scmp.eq.s32.totalorder %s23, 0
      %p128 = por %p126, %p127
      %p129 = scmp.ne.s32.totalorder %s117, %s118
      %p130 = scmp.eq.s32.totalorder %s24, 1
      %p131 = por %p129, %p130
      %p133 = scmp.ne.s32.totalorder %s118, %s132
      %p134 = scmp.eq.s32.totalorder %s24, 0
      %p135 = por %p133, %p134
      %s136 = ssub.s32 %s18, %s25
      %p137 = scmp.eq.s32.totalorder %s136, 0
      %s139 = sadd.s32 %s138, 1
      %s140 = scalar_select %p137, %s138, %s139
      %p143 = pneg %p137
      %p144 = scmp.eq.s32.totalorder %s18, 1
      %p145 = por %p143, %p144
      %p146 = scmp.ne.s32.totalorder %s138, %s141
      %p147 = scmp.eq.s32.totalorder %s18, 0
      %p148 = por %p146, %p147
      %p149 = scmp.ne.s32.totalorder %s138, %s141
      %p150 = scmp.eq.s32.totalorder %s23, 1
      %p151 = por %p149, %p150
      %p152 = scmp.ne.s32.totalorder %s141, %s142
      %p153 = scmp.eq.s32.totalorder %s23, 0
      %p154 = por %p152, %p153
      %p155 = scmp.ne.s32.totalorder %s141, %s142
      %p156 = scmp.eq.s32.totalorder %s24, 1
      %p157 = por %p155, %p156
      %p159 = scmp.ne.s32.totalorder %s142, %s158
      %p160 = scmp.eq.s32.totalorder %s24, 0
      %p161 = por %p159, %p160
      %p162 = scmp.le.s32.totalorder 1, %s18
      %p163 = scmp.lt.s32.totalorder %s18, 3
      %p164 = pnand %p162, %p163
      %p165 = pneg %p164
      // Predicated region
      $region9: #{tpu_custom_call.1} parent=5 // pred_check
        _
      $region10: #{tpu_custom_call.1} parent=5 // pred_check_branch
        %167 = sbr.rel (%p164) target = $region12
      $region11: #{tpu_custom_call.1} parent=5 // pred_region
        %s168 = ssub.s32 %s18, 1
        // Predicated region
        $region13: #{tpu_custom_call.1} parent=11 // pred_check
          %p169 = pneg %p65
        $region14: #{tpu_custom_call.1} parent=11 // pred_check_branch
          %171 = sbr.rel (%p169) target = $region16
        $region15: #{tpu_custom_call.1} parent=11 // pred_region
          %s173 = ssub.s32 1024, 1024
          %174 = vsyncadd [#allocation6], %s173
          %s175 = sshll.u32 [#allocation5], 4
          %s176 = int_to_ptr.vmem [resolvable:$true] %s175
          %181 = dma.hbm_to_vmem [thread:$0]  %s1, 1024, %s176, [#allocation6], 64, 64, 4
        $region16: #{tpu_custom_call.1} parent=11 // pred_fallthru
          _
        // Predicated region
        $region17: #{tpu_custom_call.1} parent=11 // pred_check
          %p182 = pneg %p86
        $region18: #{tpu_custom_call.1} parent=11 // pred_check_branch
          %184 = sbr.rel (%p182) target = $region20
        $region19: #{tpu_custom_call.1} parent=11 // pred_region
          _
        $region20: #{tpu_custom_call.1} parent=11 // pred_fallthru
          _
        // Predicated region
        $region21: #{tpu_custom_call.1} parent=11 // pred_check
          %p185 = pneg %p107
        $region22: #{tpu_custom_call.1} parent=11 // pred_check_branch
          %187 = sbr.rel (%p185) target = $region24
        $region23: #{tpu_custom_call.1} parent=11 // pred_region
          %s189 = ssub.s32 1024, 1024
          %190 = vsyncadd [#allocation6], %s189
          %s191 = sshll.u32 [#allocation7], 4
          %s192 = int_to_ptr.vmem [resolvable:$true] %s191
          %197 = dma.hbm_to_vmem [thread:$0]  %s3, 1024, %s192, [#allocation6], 64, 64, 4
        $region24: #{tpu_custom_call.1} parent=11 // pred_fallthru
          _
        // Predicated region
        $region25: #{tpu_custom_call.1} parent=11 // pred_check
          %p198 = pneg %p128
        $region26: #{tpu_custom_call.1} parent=11 // pred_check_branch
          %200 = sbr.rel (%p198) target = $region28
        $region27: #{tpu_custom_call.1} parent=11 // pred_region
          _
        $region28: #{tpu_custom_call.1} parent=11 // pred_fallthru
          _
      $region12: #{tpu_custom_call.1} parent=5 // pred_fallthru
        _
      %p201 = scmp.lt.s32.totalorder %s18, 2
      // Predicated region
      $region29: #{tpu_custom_call.1} parent=5 // pred_check
        %p202 = pneg %p201
      $region30: #{tpu_custom_call.1} parent=5 // pred_check_branch
        %204 = sbr.rel (%p202) target = $region32
      $region31: #{tpu_custom_call.1} parent=5 // pred_region
        // Predicated region
        $region33: #{tpu_custom_call.1} parent=31 // pred_check
          %p205 = pneg %p38
        $region34: #{tpu_custom_call.1} parent=31 // pred_check_branch
          %207 = sbr.rel (%p205) target = $region36
        $region35: #{tpu_custom_call.1} parent=31 // pred_region
          %s208 = sand.u32 %s28, 1
          %s209 = scalar_lea.sflag [#allocation3], %s208
          %s210 = sand.u32 %s28, 1
          %s211 = smul.addr %s210, 1024
          %s212 = scalar_lea.vmem [#allocation2], %s211
          %s213 = smul.u32 256, %s18
          %s215 = ssub.s32 16384, 16384
          %216 = vsyncadd %s209, %s215
          %s217 = smul.addr %s213, 64
          %s218 = scalar_lea.hbm %s0, %s217
          %s219 = sshll.u32 %s212, 4
          %s220 = int_to_ptr.vmem [resolvable:$true] %s219
          %225 = dma.hbm_to_vmem [thread:$0]  %s218, 16384, %s220, %s209, 64, 64, 4
        $region36: #{tpu_custom_call.1} parent=31 // pred_fallthru
          _
      $region32: #{tpu_custom_call.1} parent=5 // pred_fallthru
        _
      %p226 = scmp.le.s32.totalorder 1, %s18
      %p227 = scmp.lt.s32.totalorder %s18, 3
      %p228 = pnand %p226, %p227
      %p229 = pneg %p228
      // Predicated region
      $region37: #{tpu_custom_call.1} parent=5 // pred_check
        _
      $region38: #{tpu_custom_call.1} parent=5 // pred_check_branch
        %231 = sbr.rel (%p228) target = $region40
      $region39: #{tpu_custom_call.1} parent=5 // pred_region
        %s232 = ssub.s32 %s18, 1
        %s233 = sand.u32 %s31, 1
        %s234 = scalar_lea.sflag [#allocation3], %s233
        %s235 = sand.u32 %s31, 1
        %s236 = smul.addr %s235, 1024
        %s237 = scalar_lea.vmem [#allocation2], %s236
        // Predicated region
        $region41: #{tpu_custom_call.1} parent=39 // pred_check
          %p238 = pneg %p44
        $region42: #{tpu_custom_call.1} parent=39 // pred_check_branch
          %240 = sbr.rel (%p238) target = $region44
        $region43: #{tpu_custom_call.1} parent=39 // pred_region
          %241 = dma.done %s234, 16384
        $region44: #{tpu_custom_call.1} parent=39 // pred_fallthru
          _
        // Predicated region
        $region45: #{tpu_custom_call.1} parent=39 // pred_check
          %p242 = pneg %p65
        $region46: #{tpu_custom_call.1} parent=39 // pred_check_branch
          %244 = sbr.rel (%p242) target = $region48
        $region47: #{tpu_custom_call.1} parent=39 // pred_region
          %245 = dma.done [#allocation6], 1024
        $region48: #{tpu_custom_call.1} parent=39 // pred_fallthru
          _
        // Predicated region
        $region49: #{tpu_custom_call.1} parent=39 // pred_check
          %p246 = pneg %p107
        $region50: #{tpu_custom_call.1} parent=39 // pred_check_branch
          %248 = sbr.rel (%p246) target = $region52
        $region51: #{tpu_custom_call.1} parent=39 // pred_region
          %249 = dma.done [#allocation6], 1024
        $region52: #{tpu_custom_call.1} parent=39 // pred_fallthru
          _
        %s250 = sand.u32 %s31, 1
        %s251 = scalar_lea.sflag [#allocation3], %s250
        %s252 = sand.u32 %s31, 1
        %s253 = smul.addr %s252, 1024
        %s254 = scalar_lea.vmem [#allocation2], %s253
        %p255 = pneg %p44
        %p256 = pneg %p41
        %p257 = pneg %p65
        %p258 = pneg %p62
        %p259 = pneg %p86
        %p260 = pneg %p83
        %p261 = pneg %p107
        %p262 = pneg %p104
        %p263 = pneg %p128
        %p264 = pneg %p125
        %p265 = pneg %p154
        %p266 = pneg %p151
        %s267 = sand.u32 %s141, 1
        %s268 = scalar_lea.sflag [#allocation4], %s267
        %s269 = sand.u32 %s141, 1
        %s270 = smul.addr %s269, 8
        %s271 = scalar_lea.vmem [#allocation8], %s270
        %s272 = smul.u32 256, %s23
        %v274 = vld [vmem:[%s237] sm:$0xf]
        %v275 = vld [vmem:[%s237 + $0x4] sm:$0xf]
        %v276 = vld [vmem:[%s237 + $0x8] sm:$0xf]
        %v277 = vld [vmem:[%s237 + $0xc] sm:$0xf]
        %v278 = vld [vmem:[%s237 + $0x10] sm:$0xf]
        %v279 = vld [vmem:[%s237 + $0x14] sm:$0xf]
        %v280 = vld [vmem:[%s237 + $0x18] sm:$0xf]
        %v281 = vld [vmem:[%s237 + $0x1c] sm:$0xf]
        %v282 = vld [vmem:[%s237 + $0x20] sm:$0xf]
        %v283 = vld [vmem:[%s237 + $0x24] sm:$0xf]
        %v284 = vld [vmem:[%s237 + $0x28] sm:$0xf]
        %v285 = vld [vmem:[%s237 + $0x2c] sm:$0xf]
        %v286 = vld [vmem:[%s237 + $0x30] sm:$0xf]
        %v287 = vld [vmem:[%s237 + $0x34] sm:$0xf]
        %v288 = vld [vmem:[%s237 + $0x38] sm:$0xf]
        %v289 = vld [vmem:[%s237 + $0x3c] sm:$0xf]
        %v290 = vld [vmem:[%s237 + $0x40] sm:$0xf]
        %v291 = vld [vmem:[%s237 + $0x44] sm:$0xf]
        %v292 = vld [vmem:[%s237 + $0x48] sm:$0xf]
        %v293 = vld [vmem:[%s237 + $0x4c] sm:$0xf]
        %v294 = vld [vmem:[%s237 + $0x50] sm:$0xf]
        %v295 = vld [vmem:[%s237 + $0x54] sm:$0xf]
        %v296 = vld [vmem:[%s237 + $0x58] sm:$0xf]
        %v297 = vld [vmem:[%s237 + $0x5c] sm:$0xf]
        %v298 = vld [vmem:[%s237 + $0x60] sm:$0xf]
        %v299 = vld [vmem:[%s237 + $0x64] sm:$0xf]
        %v300 = vld [vmem:[%s237 + $0x68] sm:$0xf]
        %v301 = vld [vmem:[%s237 + $0x6c] sm:$0xf]
        %v302 = vld [vmem:[%s237 + $0x70] sm:$0xf]
        %v303 = vld [vmem:[%s237 + $0x74] sm:$0xf]
        %v304 = vld [vmem:[%s237 + $0x78] sm:$0xf]
        %v305 = vld [vmem:[%s237 + $0x7c] sm:$0xf]
        %v306 = vld [vmem:[%s237 + $0x80] sm:$0xf]
        %v307 = vld [vmem:[%s237 + $0x84] sm:$0xf]
        %v308 = vld [vmem:[%s237 + $0x88] sm:$0xf]
        %v309 = vld [vmem:[%s237 + $0x8c] sm:$0xf]
        %v310 = vld [vmem:[%s237 + $0x90] sm:$0xf]
        %v311 = vld [vmem:[%s237 + $0x94] sm:$0xf]
        %v312 = vld [vmem:[%s237 + $0x98] sm:$0xf]
        %v313 = vld [vmem:[%s237 + $0x9c] sm:$0xf]
        %v314 = vld [vmem:[%s237 + $0xa0] sm:$0xf]
        %v315 = vld [vmem:[%s237 + $0xa4] sm:$0xf]
        %v316 = vld [vmem:[%s237 + $0xa8] sm:$0xf]
        %v317 = vld [vmem:[%s237 + $0xac] sm:$0xf]
        %v318 = vld [vmem:[%s237 + $0xb0] sm:$0xf]
        %v319 = vld [vmem:[%s237 + $0xb4] sm:$0xf]
        %v320 = vld [vmem:[%s237 + $0xb8] sm:$0xf]
        %v321 = vld [vmem:[%s237 + $0xbc] sm:$0xf]
        %v322 = vld [vmem:[%s237 + $0xc0] sm:$0xf]
        %v323 = vld [vmem:[%s237 + $0xc4] sm:$0xf]
        %v324 = vld [vmem:[%s237 + $0xc8] sm:$0xf]
        %v325 = vld [vmem:[%s237 + $0xcc] sm:$0xf]
        %v326 = vld [vmem:[%s237 + $0xd0] sm:$0xf]
        %v327 = vld [vmem:[%s237 + $0xd4] sm:$0xf]
        %v328 = vld [vmem:[%s237 + $0xd8] sm:$0xf]
        %v329 = vld [vmem:[%s237 + $0xdc] sm:$0xf]
        %v330 = vld [vmem:[%s237 + $0xe0] sm:$0xf]
        %v331 = vld [vmem:[%s237 + $0xe4] sm:$0xf]
        %v332 = vld [vmem:[%s237 + $0xe8] sm:$0xf]
        %v333 = vld [vmem:[%s237 + $0xec] sm:$0xf]
        %v334 = vld [vmem:[%s237 + $0xf0] sm:$0xf]
        %v335 = vld [vmem:[%s237 + $0xf4] sm:$0xf]
        %v336 = vld [vmem:[%s237 + $0xf8] sm:$0xf]
        %v337 = vld [vmem:[%s237 + $0xfc] sm:$0xf]
        %v338 = vld [vmem:[%s237 + $0x100] sm:$0xf]
        %v339 = vld [vmem:[%s237 + $0x104] sm:$0xf]
        %v340 = vld [vmem:[%s237 + $0x108] sm:$0xf]
        %v341 = vld [vmem:[%s237 + $0x10c] sm:$0xf]
        %v342 = vld [vmem:[%s237 + $0x110] sm:$0xf]
        %v343 = vld [vmem:[%s237 + $0x114] sm:$0xf]
        %v344 = vld [vmem:[%s237 + $0x118] sm:$0xf]
        %v345 = vld [vmem:[%s237 + $0x11c] sm:$0xf]
        %v346 = vld [vmem:[%s237 + $0x120] sm:$0xf]
        %v347 = vld [vmem:[%s237 + $0x124] sm:$0xf]
        %v348 = vld [vmem:[%s237 + $0x128] sm:$0xf]
        %v349 = vld [vmem:[%s237 + $0x12c] sm:$0xf]
        %v350 = vld [vmem:[%s237 + $0x130] sm:$0xf]
        %v351 = vld [vmem:[%s237 + $0x134] sm:$0xf]
        %v352 = vld [vmem:[%s237 + $0x138] sm:$0xf]
        %v353 = vld [vmem:[%s237 + $0x13c] sm:$0xf]
        %v354 = vld [vmem:[%s237 + $0x140] sm:$0xf]
        %v355 = vld [vmem:[%s237 + $0x144] sm:$0xf]
        %v356 = vld [vmem:[%s237 + $0x148] sm:$0xf]
        %v357 = vld [vmem:[%s237 + $0x14c] sm:$0xf]
        %v358 = vld [vmem:[%s237 + $0x150] sm:$0xf]
        %v359 = vld [vmem:[%s237 + $0x154] sm:$0xf]
        %v360 = vld [vmem:[%s237 + $0x158] sm:$0xf]
        %v361 = vld [vmem:[%s237 + $0x15c] sm:$0xf]
        %v362 = vld [vmem:[%s237 + $0x160] sm:$0xf]
        %v363 = vld [vmem:[%s237 + $0x164] sm:$0xf]
        %v364 = vld [vmem:[%s237 + $0x168] sm:$0xf]
        %v365 = vld [vmem:[%s237 + $0x16c] sm:$0xf]
        %v366 = vld [vmem:[%s237 + $0x170] sm:$0xf]
        %v367 = vld [vmem:[%s237 + $0x174] sm:$0xf]
        %v368 = vld [vmem:[%s237 + $0x178] sm:$0xf]
        %v369 = vld [vmem:[%s237 + $0x17c] sm:$0xf]
        %v370 = vld [vmem:[%s237 + $0x180] sm:$0xf]
        %v371 = vld [vmem:[%s237 + $0x184] sm:$0xf]
        %v372 = vld [vmem:[%s237 + $0x188] sm:$0xf]
        %v373 = vld [vmem:[%s237 + $0x18c] sm:$0xf]
        %v374 = vld [vmem:[%s237 + $0x190] sm:$0xf]
        %v375 = vld [vmem:[%s237 + $0x194] sm:$0xf]
        %v376 = vld [vmem:[%s237 + $0x198] sm:$0xf]
        %v377 = vld [vmem:[%s237 + $0x19c] sm:$0xf]
        %v378 = vld [vmem:[%s237 + $0x1a0] sm:$0xf]
        %v379 = vld [vmem:[%s237 + $0x1a4] sm:$0xf]
        %v380 = vld [vmem:[%s237 + $0x1a8] sm:$0xf]
        %v381 = vld [vmem:[%s237 + $0x1ac] sm:$0xf]
        %v382 = vld [vmem:[%s237 + $0x1b0] sm:$0xf]
        %v383 = vld [vmem:[%s237 + $0x1b4] sm:$0xf]
        %v384 = vld [vmem:[%s237 + $0x1b8] sm:$0xf]
        %v385 = vld [vmem:[%s237 + $0x1bc] sm:$0xf]
        %v386 = vld [vmem:[%s237 + $0x1c0] sm:$0xf]
        %v387 = vld [vmem:[%s237 + $0x1c4] sm:$0xf]
        %v388 = vld [vmem:[%s237 + $0x1c8] sm:$0xf]
        %v389 = vld [vmem:[%s237 + $0x1cc] sm:$0xf]
        %v390 = vld [vmem:[%s237 + $0x1d0] sm:$0xf]
        %v391 = vld [vmem:[%s237 + $0x1d4] sm:$0xf]
        %v392 = vld [vmem:[%s237 + $0x1d8] sm:$0xf]
        %v393 = vld [vmem:[%s237 + $0x1dc] sm:$0xf]
        %v394 = vld [vmem:[%s237 + $0x1e0] sm:$0xf]
        %v395 = vld [vmem:[%s237 + $0x1e4] sm:$0xf]
        %v396 = vld [vmem:[%s237 + $0x1e8] sm:$0xf]
        %v397 = vld [vmem:[%s237 + $0x1ec] sm:$0xf]
        %v398 = vld [vmem:[%s237 + $0x1f0] sm:$0xf]
        %v399 = vld [vmem:[%s237 + $0x1f4] sm:$0xf]
        %v400 = vld [vmem:[%s237 + $0x1f8] sm:$0xf]
        %v401 = vld [vmem:[%s237 + $0x1fc] sm:$0xf]
        %v402 = vld [vmem:[%s237 + $0x200] sm:$0xf]
        %v403 = vld [vmem:[%s237 + $0x204] sm:$0xf]
        %v404 = vld [vmem:[%s237 + $0x208] sm:$0xf]
        %v405 = vld [vmem:[%s237 + $0x20c] sm:$0xf]
        %v406 = vld [vmem:[%s237 + $0x210] sm:$0xf]
        %v407 = vld [vmem:[%s237 + $0x214] sm:$0xf]
        %v408 = vld [vmem:[%s237 + $0x218] sm:$0xf]
        %v409 = vld [vmem:[%s237 + $0x21c] sm:$0xf]
        %v410 = vld [vmem:[%s237 + $0x220] sm:$0xf]
        %v411 = vld [vmem:[%s237 + $0x224] sm:$0xf]
        %v412 = vld [vmem:[%s237 + $0x228] sm:$0xf]
        %v413 = vld [vmem:[%s237 + $0x22c] sm:$0xf]
        %v414 = vld [vmem:[%s237 + $0x230] sm:$0xf]
        %v415 = vld [vmem:[%s237 + $0x234] sm:$0xf]
        %v416 = vld [vmem:[%s237 + $0x238] sm:$0xf]
        %v417 = vld [vmem:[%s237 + $0x23c] sm:$0xf]
        %v418 = vld [vmem:[%s237 + $0x240] sm:$0xf]
        %v419 = vld [vmem:[%s237 + $0x244] sm:$0xf]
        %v420 = vld [vmem:[%s237 + $0x248] sm:$0xf]
        %v421 = vld [vmem:[%s237 + $0x24c] sm:$0xf]
        %v422 = vld [vmem:[%s237 + $0x250] sm:$0xf]
        %v423 = vld [vmem:[%s237 + $0x254] sm:$0xf]
        %v424 = vld [vmem:[%s237 + $0x258] sm:$0xf]
        %v425 = vld [vmem:[%s237 + $0x25c] sm:$0xf]
        %v426 = vld [vmem:[%s237 + $0x260] sm:$0xf]
        %v427 = vld [vmem:[%s237 + $0x264] sm:$0xf]
        %v428 = vld [vmem:[%s237 + $0x268] sm:$0xf]
        %v429 = vld [vmem:[%s237 + $0x26c] sm:$0xf]
        %v430 = vld [vmem:[%s237 + $0x270] sm:$0xf]
        %v431 = vld [vmem:[%s237 + $0x274] sm:$0xf]
        %v432 = vld [vmem:[%s237 + $0x278] sm:$0xf]
        %v433 = vld [vmem:[%s237 + $0x27c] sm:$0xf]
        %v434 = vld [vmem:[%s237 + $0x280] sm:$0xf]
        %v435 = vld [vmem:[%s237 + $0x284] sm:$0xf]
        %v436 = vld [vmem:[%s237 + $0x288] sm:$0xf]
        %v437 = vld [vmem:[%s237 + $0x28c] sm:$0xf]
        %v438 = vld [vmem:[%s237 + $0x290] sm:$0xf]
        %v439 = vld [vmem:[%s237 + $0x294] sm:$0xf]
        %v440 = vld [vmem:[%s237 + $0x298] sm:$0xf]
        %v441 = vld [vmem:[%s237 + $0x29c] sm:$0xf]
        %v442 = vld [vmem:[%s237 + $0x2a0] sm:$0xf]
        %v443 = vld [vmem:[%s237 + $0x2a4] sm:$0xf]
        %v444 = vld [vmem:[%s237 + $0x2a8] sm:$0xf]
        %v445 = vld [vmem:[%s237 + $0x2ac] sm:$0xf]
        %v446 = vld [vmem:[%s237 + $0x2b0] sm:$0xf]
        %v447 = vld [vmem:[%s237 + $0x2b4] sm:$0xf]
        %v448 = vld [vmem:[%s237 + $0x2b8] sm:$0xf]
        %v449 = vld [vmem:[%s237 + $0x2bc] sm:$0xf]
        %v450 = vld [vmem:[%s237 + $0x2c0] sm:$0xf]
        %v451 = vld [vmem:[%s237 + $0x2c4] sm:$0xf]
        %v452 = vld [vmem:[%s237 + $0x2c8] sm:$0xf]
        %v453 = vld [vmem:[%s237 + $0x2cc] sm:$0xf]
        %v454 = vld [vmem:[%s237 + $0x2d0] sm:$0xf]
        %v455 = vld [vmem:[%s237 + $0x2d4] sm:$0xf]
        %v456 = vld [vmem:[%s237 + $0x2d8] sm:$0xf]
        %v457 = vld [vmem:[%s237 + $0x2dc] sm:$0xf]
        %v458 = vld [vmem:[%s237 + $0x2e0] sm:$0xf]
        %v459 = vld [vmem:[%s237 + $0x2e4] sm:$0xf]
        %v460 = vld [vmem:[%s237 + $0x2e8] sm:$0xf]
        %v461 = vld [vmem:[%s237 + $0x2ec] sm:$0xf]
        %v462 = vld [vmem:[%s237 + $0x2f0] sm:$0xf]
        %v463 = vld [vmem:[%s237 + $0x2f4] sm:$0xf]
        %v464 = vld [vmem:[%s237 + $0x2f8] sm:$0xf]
        %v465 = vld [vmem:[%s237 + $0x2fc] sm:$0xf]
        %v466 = vld [vmem:[%s237 + $0x300] sm:$0xf]
        %v467 = vld [vmem:[%s237 + $0x304] sm:$0xf]
        %v468 = vld [vmem:[%s237 + $0x308] sm:$0xf]
        %v469 = vld [vmem:[%s237 + $0x30c] sm:$0xf]
        %v470 = vld [vmem:[%s237 + $0x310] sm:$0xf]
        %v471 = vld [vmem:[%s237 + $0x314] sm:$0xf]
        %v472 = vld [vmem:[%s237 + $0x318] sm:$0xf]
        %v473 = vld [vmem:[%s237 + $0x31c] sm:$0xf]
        %v474 = vld [vmem:[%s237 + $0x320] sm:$0xf]
        %v475 = vld [vmem:[%s237 + $0x324] sm:$0xf]
        %v476 = vld [vmem:[%s237 + $0x328] sm:$0xf]
        %v477 = vld [vmem:[%s237 + $0x32c] sm:$0xf]
        %v478 = vld [vmem:[%s237 + $0x330] sm:$0xf]
        %v479 = vld [vmem:[%s237 + $0x334] sm:$0xf]
        %v480 = vld [vmem:[%s237 + $0x338] sm:$0xf]
        %v481 = vld [vmem:[%s237 + $0x33c] sm:$0xf]
        %v482 = vld [vmem:[%s237 + $0x340] sm:$0xf]
        %v483 = vld [vmem:[%s237 + $0x344] sm:$0xf]
        %v484 = vld [vmem:[%s237 + $0x348] sm:$0xf]
        %v485 = vld [vmem:[%s237 + $0x34c] sm:$0xf]
        %v486 = vld [vmem:[%s237 + $0x350] sm:$0xf]
        %v487 = vld [vmem:[%s237 + $0x354] sm:$0xf]
        %v488 = vld [vmem:[%s237 + $0x358] sm:$0xf]
        %v489 = vld [vmem:[%s237 + $0x35c] sm:$0xf]
        %v490 = vld [vmem:[%s237 + $0x360] sm:$0xf]
        %v491 = vld [vmem:[%s237 + $0x364] sm:$0xf]
        %v492 = vld [vmem:[%s237 + $0x368] sm:$0xf]
        %v493 = vld [vmem:[%s237 + $0x36c] sm:$0xf]
        %v494 = vld [vmem:[%s237 + $0x370] sm:$0xf]
        %v495 = vld [vmem:[%s237 + $0x374] sm:$0xf]
        %v496 = vld [vmem:[%s237 + $0x378] sm:$0xf]
        %v497 = vld [vmem:[%s237 + $0x37c] sm:$0xf]
        %v498 = vld [vmem:[%s237 + $0x380] sm:$0xf]
        %v499 = vld [vmem:[%s237 + $0x384] sm:$0xf]
        %v500 = vld [vmem:[%s237 + $0x388] sm:$0xf]
        %v501 = vld [vmem:[%s237 + $0x38c] sm:$0xf]
        %v502 = vld [vmem:[%s237 + $0x390] sm:$0xf]
        %v503 = vld [vmem:[%s237 + $0x394] sm:$0xf]
        %v504 = vld [vmem:[%s237 + $0x398] sm:$0xf]
        %v505 = vld [vmem:[%s237 + $0x39c] sm:$0xf]
        %v506 = vld [vmem:[%s237 + $0x3a0] sm:$0xf]
        %v507 = vld [vmem:[%s237 + $0x3a4] sm:$0xf]
        %v508 = vld [vmem:[%s237 + $0x3a8] sm:$0xf]
        %v509 = vld [vmem:[%s237 + $0x3ac] sm:$0xf]
        %v510 = vld [vmem:[%s237 + $0x3b0] sm:$0xf]
        %v511 = vld [vmem:[%s237 + $0x3b4] sm:$0xf]
        %v512 = vld [vmem:[%s237 + $0x3b8] sm:$0xf]
        %v513 = vld [vmem:[%s237 + $0x3bc] sm:$0xf]
        %v514 = vld [vmem:[%s237 + $0x3c0] sm:$0xf]
        %v515 = vld [vmem:[%s237 + $0x3c4] sm:$0xf]
        %v516 = vld [vmem:[%s237 + $0x3c8] sm:$0xf]
        %v517 = vld [vmem:[%s237 + $0x3cc] sm:$0xf]
        %v518 = vld [vmem:[%s237 + $0x3d0] sm:$0xf]
        %v519 = vld [vmem:[%s237 + $0x3d4] sm:$0xf]
        %v520 = vld [vmem:[%s237 + $0x3d8] sm:$0xf]
        %v521 = vld [vmem:[%s237 + $0x3dc] sm:$0xf]
        %v522 = vld [vmem:[%s237 + $0x3e0] sm:$0xf]
        %v523 = vld [vmem:[%s237 + $0x3e4] sm:$0xf]
        %v524 = vld [vmem:[%s237 + $0x3e8] sm:$0xf]
        %v525 = vld [vmem:[%s237 + $0x3ec] sm:$0xf]
        %v526 = vld [vmem:[%s237 + $0x3f0] sm:$0xf]
        %v527 = vld [vmem:[%s237 + $0x3f4] sm:$0xf]
        %v528 = vld [vmem:[%s237 + $0x3f8] sm:$0xf]
        %v529 = vld [vmem:[%s237 + $0x3fc] sm:$0xf]
        %v530 = vld [vmem:[#allocation5] sm:$0xf]
        %v531 = vld [vmem:[#allocation5 + $0x4] sm:$0xf]
        %v532 = vld [vmem:[#allocation5 + $0x8] sm:$0xf]
        %v533 = vld [vmem:[#allocation5 + $0xc] sm:$0xf]
        %v534 = vld [vmem:[#allocation5 + $0x10] sm:$0xf]
        %v535 = vld [vmem:[#allocation5 + $0x14] sm:$0xf]
        %v536 = vld [vmem:[#allocation5 + $0x18] sm:$0xf]
        %v537 = vld [vmem:[#allocation5 + $0x1c] sm:$0xf]
        %v538 = vld [vmem:[#allocation5 + $0x20] sm:$0xf]
        %v539 = vld [vmem:[#allocation5 + $0x24] sm:$0xf]
        %v540 = vld [vmem:[#allocation5 + $0x28] sm:$0xf]
        %v541 = vld [vmem:[#allocation5 + $0x2c] sm:$0xf]
        %v542 = vld [vmem:[#allocation5 + $0x30] sm:$0xf]
        %v543 = vld [vmem:[#allocation5 + $0x34] sm:$0xf]
        %v544 = vld [vmem:[#allocation5 + $0x38] sm:$0xf]
        %v545 = vld [vmem:[#allocation5 + $0x3c] sm:$0xf]
        %v546 = vld [vmem:[%s2] sm:$0x1]
        %v548 = vlaneseq
        %v549 = vshrl.u32 %v548, 7
        %v550 = vsub.s32 0, %v549
        %v551 = vrot.slane %v546, %v550
        %v809 = vunpack.c.l.b16 %v274
        %v810 = vunpack.c.l.b16 %v275
        %v811 = vunpack.c.l.b16 %v276
        %v812 = vunpack.c.l.b16 %v277
        %v813 = vunpack.c.l.b16 %v278
        %v814 = vunpack.c.l.b16 %v279
        %v815 = vunpack.c.l.b16 %v280
        %v816 = vunpack.c.l.b16 %v281
        %v817 = vunpack.c.l.b16 %v282
        %v818 = vunpack.c.l.b16 %v283
        %v819 = vunpack.c.l.b16 %v284
        %v820 = vunpack.c.l.b16 %v285
        %v821 = vunpack.c.l.b16 %v286
        %v822 = vunpack.c.l.b16 %v287
        %v823 = vunpack.c.l.b16 %v288
        %v824 = vunpack.c.l.b16 %v289
        %v825 = vunpack.c.l.b16 %v290
        %v826 = vunpack.c.l.b16 %v291
        %v827 = vunpack.c.l.b16 %v292
        %v828 = vunpack.c.l.b16 %v293
        %v829 = vunpack.c.l.b16 %v294
        %v830 = vunpack.c.l.b16 %v295
        %v831 = vunpack.c.l.b16 %v296
        %v832 = vunpack.c.l.b16 %v297
        %v833 = vunpack.c.l.b16 %v298
        %v834 = vunpack.c.l.b16 %v299
        %v835 = vunpack.c.l.b16 %v300
        %v836 = vunpack.c.l.b16 %v301
        %v837 = vunpack.c.l.b16 %v302
        %v838 = vunpack.c.l.b16 %v303
        %v839 = vunpack.c.l.b16 %v304
        %v840 = vunpack.c.l.b16 %v305
        %v841 = vunpack.c.l.b16 %v306
        %v842 = vunpack.c.l.b16 %v307
        %v843 = vunpack.c.l.b16 %v308
        %v844 = vunpack.c.l.b16 %v309
        %v845 = vunpack.c.l.b16 %v310
        %v846 = vunpack.c.l.b16 %v311
        %v847 = vunpack.c.l.b16 %v312
        %v848 = vunpack.c.l.b16 %v313
        %v849 = vunpack.c.l.b16 %v314
        %v850 = vunpack.c.l.b16 %v315
        %v851 = vunpack.c.l.b16 %v316
        %v852 = vunpack.c.l.b16 %v317
        %v853 = vunpack.c.l.b16 %v318
        %v854 = vunpack.c.l.b16 %v319
        %v855 = vunpack.c.l.b16 %v320
        %v856 = vunpack.c.l.b16 %v321
        %v857 = vunpack.c.l.b16 %v322
        %v858 = vunpack.c.l.b16 %v323
        %v859 = vunpack.c.l.b16 %v324
        %v860 = vunpack.c.l.b16 %v325
        %v861 = vunpack.c.l.b16 %v326
        %v862 = vunpack.c.l.b16 %v327
        %v863 = vunpack.c.l.b16 %v328
        %v864 = vunpack.c.l.b16 %v329
        %v865 = vunpack.c.l.b16 %v330
        %v866 = vunpack.c.l.b16 %v331
        %v867 = vunpack.c.l.b16 %v332
        %v868 = vunpack.c.l.b16 %v333
        %v869 = vunpack.c.l.b16 %v334
        %v870 = vunpack.c.l.b16 %v335
        %v871 = vunpack.c.l.b16 %v336
        %v872 = vunpack.c.l.b16 %v337
        %v873 = vunpack.c.l.b16 %v338
        %v874 = vunpack.c.l.b16 %v339
        %v875 = vunpack.c.l.b16 %v340
        %v876 = vunpack.c.l.b16 %v341
        %v877 = vunpack.c.l.b16 %v342
        %v878 = vunpack.c.l.b16 %v343
        %v879 = vunpack.c.l.b16 %v344
        %v880 = vunpack.c.l.b16 %v345
        %v881 = vunpack.c.l.b16 %v346
        %v882 = vunpack.c.l.b16 %v347
        %v883 = vunpack.c.l.b16 %v348
        %v884 = vunpack.c.l.b16 %v349
        %v885 = vunpack.c.l.b16 %v350
        %v886 = vunpack.c.l.b16 %v351
        %v887 = vunpack.c.l.b16 %v352
        %v888 = vunpack.c.l.b16 %v353
        %v889 = vunpack.c.l.b16 %v354
        %v890 = vunpack.c.l.b16 %v355
        %v891 = vunpack.c.l.b16 %v356
        %v892 = vunpack.c.l.b16 %v357
        %v893 = vunpack.c.l.b16 %v358
        %v894 = vunpack.c.l.b16 %v359
        %v895 = vunpack.c.l.b16 %v360
        %v896 = vunpack.c.l.b16 %v361
        %v897 = vunpack.c.l.b16 %v362
        %v898 = vunpack.c.l.b16 %v363
        %v899 = vunpack.c.l.b16 %v364
        %v900 = vunpack.c.l.b16 %v365
        %v901 = vunpack.c.l.b16 %v366
        %v902 = vunpack.c.l.b16 %v367
        %v903 = vunpack.c.l.b16 %v368
        %v904 = vunpack.c.l.b16 %v369
        %v905 = vunpack.c.l.b16 %v370
        %v906 = vunpack.c.l.b16 %v371
        %v907 = vunpack.c.l.b16 %v372
        %v908 = vunpack.c.l.b16 %v373
        %v909 = vunpack.c.l.b16 %v374
        %v910 = vunpack.c.l.b16 %v375
        %v911 = vunpack.c.l.b16 %v376
        %v912 = vunpack.c.l.b16 %v377
        %v913 = vunpack.c.l.b16 %v378
        %v914 = vunpack.c.l.b16 %v379
        %v915 = vunpack.c.l.b16 %v380
        %v916 = vunpack.c.l.b16 %v381
        %v917 = vunpack.c.l.b16 %v382
        %v918 = vunpack.c.l.b16 %v383
        %v919 = vunpack.c.l.b16 %v384
        %v920 = vunpack.c.l.b16 %v385
        %v921 = vunpack.c.l.b16 %v386
        %v922 = vunpack.c.l.b16 %v387
        %v923 = vunpack.c.l.b16 %v388
        %v924 = vunpack.c.l.b16 %v389
        %v925 = vunpack.c.l.b16 %v390
        %v926 = vunpack.c.l.b16 %v391
        %v927 = vunpack.c.l.b16 %v392
        %v928 = vunpack.c.l.b16 %v393
        %v929 = vunpack.c.l.b16 %v394
        %v930 = vunpack.c.l.b16 %v395
        %v931 = vunpack.c.l.b16 %v396
        %v932 = vunpack.c.l.b16 %v397
        %v933 = vunpack.c.l.b16 %v398
        %v934 = vunpack.c.l.b16 %v399
        %v935 = vunpack.c.l.b16 %v400
        %v936 = vunpack.c.l.b16 %v401
        %v937 = vunpack.c.l.b16 %v402
        %v938 = vunpack.c.l.b16 %v403
        %v939 = vunpack.c.l.b16 %v404
        %v940 = vunpack.c.l.b16 %v405
        %v941 = vunpack.c.l.b16 %v406
        %v942 = vunpack.c.l.b16 %v407
        %v943 = vunpack.c.l.b16 %v408
        %v944 = vunpack.c.l.b16 %v409
        %v945 = vunpack.c.l.b16 %v410
        %v946 = vunpack.c.l.b16 %v411
        %v947 = vunpack.c.l.b16 %v412
        %v948 = vunpack.c.l.b16 %v413
        %v949 = vunpack.c.l.b16 %v414
        %v950 = vunpack.c.l.b16 %v415
        %v951 = vunpack.c.l.b16 %v416
        %v952 = vunpack.c.l.b16 %v417
        %v953 = vunpack.c.l.b16 %v418
        %v954 = vunpack.c.l.b16 %v419
        %v955 = vunpack.c.l.b16 %v420
        %v956 = vunpack.c.l.b16 %v421
        %v957 = vunpack.c.l.b16 %v422
        %v958 = vunpack.c.l.b16 %v423
        %v959 = vunpack.c.l.b16 %v424
        %v960 = vunpack.c.l.b16 %v425
        %v961 = vunpack.c.l.b16 %v426
        %v962 = vunpack.c.l.b16 %v427
        %v963 = vunpack.c.l.b16 %v428
        %v964 = vunpack.c.l.b16 %v429
        %v965 = vunpack.c.l.b16 %v430
        %v966 = vunpack.c.l.b16 %v431
        %v967 = vunpack.c.l.b16 %v432
        %v968 = vunpack.c.l.b16 %v433
        %v969 = vunpack.c.l.b16 %v434
        %v970 = vunpack.c.l.b16 %v435
        %v971 = vunpack.c.l.b16 %v436
        %v972 = vunpack.c.l.b16 %v437
        %v973 = vunpack.c.l.b16 %v438
        %v974 = vunpack.c.l.b16 %v439
        %v975 = vunpack.c.l.b16 %v440
        %v976 = vunpack.c.l.b16 %v441
        %v977 = vunpack.c.l.b16 %v442
        %v978 = vunpack.c.l.b16 %v443
        %v979 = vunpack.c.l.b16 %v444
        %v980 = vunpack.c.l.b16 %v445
        %v981 = vunpack.c.l.b16 %v446
        %v982 = vunpack.c.l.b16 %v447
        %v983 = vunpack.c.l.b16 %v448
        %v984 = vunpack.c.l.b16 %v449
        %v985 = vunpack.c.l.b16 %v450
        %v986 = vunpack.c.l.b16 %v451
        %v987 = vunpack.c.l.b16 %v452
        %v988 = vunpack.c.l.b16 %v453
        %v989 = vunpack.c.l.b16 %v454
        %v990 = vunpack.c.l.b16 %v455
        %v991 = vunpack.c.l.b16 %v456
        %v992 = vunpack.c.l.b16 %v457
        %v993 = vunpack.c.l.b16 %v458
        %v994 = vunpack.c.l.b16 %v459
        %v995 = vunpack.c.l.b16 %v460
        %v996 = vunpack.c.l.b16 %v461
        %v997 = vunpack.c.l.b16 %v462
        %v998 = vunpack.c.l.b16 %v463
        %v999 = vunpack.c.l.b16 %v464
        %v1000 = vunpack.c.l.b16 %v465
        %v1001 = vunpack.c.l.b16 %v466
        %v1002 = vunpack.c.l.b16 %v467
        %v1003 = vunpack.c.l.b16 %v468
        %v1004 = vunpack.c.l.b16 %v469
        %v1005 = vunpack.c.l.b16 %v470
        %v1006 = vunpack.c.l.b16 %v471
        %v1007 = vunpack.c.l.b16 %v472
        %v1008 = vunpack.c.l.b16 %v473
        %v1009 = vunpack.c.l.b16 %v474
        %v1010 = vunpack.c.l.b16 %v475
        %v1011 = vunpack.c.l.b16 %v476
        %v1012 = vunpack.c.l.b16 %v477
        %v1013 = vunpack.c.l.b16 %v478
        %v1014 = vunpack.c.l.b16 %v479
        %v1015 = vunpack.c.l.b16 %v480
        %v1016 = vunpack.c.l.b16 %v481
        %v1017 = vunpack.c.l.b16 %v482
        %v1018 = vunpack.c.l.b16 %v483
        %v1019 = vunpack.c.l.b16 %v484
        %v1020 = vunpack.c.l.b16 %v485
        %v1021 = vunpack.c.l.b16 %v486
        %v1022 = vunpack.c.l.b16 %v487
        %v1023 = vunpack.c.l.b16 %v488
        %v1024 = vunpack.c.l.b16 %v489
        %v1025 = vunpack.c.l.b16 %v490
        %v1026 = vunpack.c.l.b16 %v491
        %v1027 = vunpack.c.l.b16 %v492
        %v1028 = vunpack.c.l.b16 %v493
        %v1029 = vunpack.c.l.b16 %v494
        %v1030 = vunpack.c.l.b16 %v495
        %v1031 = vunpack.c.l.b16 %v496
        %v1032 = vunpack.c.l.b16 %v497
        %v1033 = vunpack.c.l.b16 %v498
        %v1034 = vunpack.c.l.b16 %v499
        %v1035 = vunpack.c.l.b16 %v500
        %v1036 = vunpack.c.l.b16 %v501
        %v1037 = vunpack.c.l.b16 %v502
        %v1038 = vunpack.c.l.b16 %v503
        %v1039 = vunpack.c.l.b16 %v504
        %v1040 = vunpack.c.l.b16 %v505
        %v1041 = vunpack.c.l.b16 %v506
        %v1042 = vunpack.c.l.b16 %v507
        %v1043 = vunpack.c.l.b16 %v508
        %v1044 = vunpack.c.l.b16 %v509
        %v1045 = vunpack.c.l.b16 %v510
        %v1046 = vunpack.c.l.b16 %v511
        %v1047 = vunpack.c.l.b16 %v512
        %v1048 = vunpack.c.l.b16 %v513
        %v1049 = vunpack.c.l.b16 %v514
        %v1050 = vunpack.c.l.b16 %v515
        %v1051 = vunpack.c.l.b16 %v516
        %v1052 = vunpack.c.l.b16 %v517
        %v1053 = vunpack.c.l.b16 %v518
        %v1054 = vunpack.c.l.b16 %v519
        %v1055 = vunpack.c.l.b16 %v520
        %v1056 = vunpack.c.l.b16 %v521
        %v1057 = vunpack.c.l.b16 %v522
        %v1058 = vunpack.c.l.b16 %v523
        %v1059 = vunpack.c.l.b16 %v524
        %v1060 = vunpack.c.l.b16 %v525
        %v1061 = vunpack.c.l.b16 %v526
        %v1062 = vunpack.c.l.b16 %v527
        %v1063 = vunpack.c.l.b16 %v528
        %v1064 = vunpack.c.l.b16 %v529
        %v1065 = vpack.c.b16 %v810, %v809
        %v1066 = vpack.c.b16 %v812, %v811
        %v1067 = vpack.c.b16 %v814, %v813
        %v1068 = vpack.c.b16 %v816, %v815
        %v1069 = vpack.c.b16 %v818, %v817
        %v1070 = vpack.c.b16 %v820, %v819
        %v1071 = vpack.c.b16 %v822, %v821
        %v1072 = vpack.c.b16 %v824, %v823
        %v1073 = vpack.c.b16 %v826, %v825
        %v1074 = vpack.c.b16 %v828, %v827
        %v1075 = vpack.c.b16 %v830, %v829
        %v1076 = vpack.c.b16 %v832, %v831
        %v1077 = vpack.c.b16 %v834, %v833
        %v1078 = vpack.c.b16 %v836, %v835
        %v1079 = vpack.c.b16 %v838, %v837
        %v1080 = vpack.c.b16 %v840, %v839
        %v1081 = vpack.c.b16 %v842, %v841
        %v1082 = vpack.c.b16 %v844, %v843
        %v1083 = vpack.c.b16 %v846, %v845
        %v1084 = vpack.c.b16 %v848, %v847
        %v1085 = vpack.c.b16 %v850, %v849
        %v1086 = vpack.c.b16 %v852, %v851
        %v1087 = vpack.c.b16 %v854, %v853
        %v1088 = vpack.c.b16 %v856, %v855
        %v1089 = vpack.c.b16 %v858, %v857
        %v1090 = vpack.c.b16 %v860, %v859
        %v1091 = vpack.c.b16 %v862, %v861
        %v1092 = vpack.c.b16 %v864, %v863
        %v1093 = vpack.c.b16 %v866, %v865
        %v1094 = vpack.c.b16 %v868, %v867
        %v1095 = vpack.c.b16 %v870, %v869
        %v1096 = vpack.c.b16 %v872, %v871
        %v1097 = vpack.c.b16 %v874, %v873
        %v1098 = vpack.c.b16 %v876, %v875
        %v1099 = vpack.c.b16 %v878, %v877
        %v1100 = vpack.c.b16 %v880, %v879
        %v1101 = vpack.c.b16 %v882, %v881
        %v1102 = vpack.c.b16 %v884, %v883
        %v1103 = vpack.c.b16 %v886, %v885
        %v1104 = vpack.c.b16 %v888, %v887
        %v1105 = vpack.c.b16 %v890, %v889
        %v1106 = vpack.c.b16 %v892, %v891
        %v1107 = vpack.c.b16 %v894, %v893
        %v1108 = vpack.c.b16 %v896, %v895
        %v1109 = vpack.c.b16 %v898, %v897
        %v1110 = vpack.c.b16 %v900, %v899
        %v1111 = vpack.c.b16 %v902, %v901
        %v1112 = vpack.c.b16 %v904, %v903
        %v1113 = vpack.c.b16 %v906, %v905
        %v1114 = vpack.c.b16 %v908, %v907
        %v1115 = vpack.c.b16 %v910, %v909
        %v1116 = vpack.c.b16 %v912, %v911
        %v1117 = vpack.c.b16 %v914, %v913
        %v1118 = vpack.c.b16 %v916, %v915
        %v1119 = vpack.c.b16 %v918, %v917
        %v1120 = vpack.c.b16 %v920, %v919
        %v1121 = vpack.c.b16 %v922, %v921
        %v1122 = vpack.c.b16 %v924, %v923
        %v1123 = vpack.c.b16 %v926, %v925
        %v1124 = vpack.c.b16 %v928, %v927
        %v1125 = vpack.c.b16 %v930, %v929
        %v1126 = vpack.c.b16 %v932, %v931
        %v1127 = vpack.c.b16 %v934, %v933
        %v1128 = vpack.c.b16 %v936, %v935
        %v1129 = vpack.c.b16 %v938, %v937
        %v1130 = vpack.c.b16 %v940, %v939
        %v1131 = vpack.c.b16 %v942, %v941
        %v1132 = vpack.c.b16 %v944, %v943
        %v1133 = vpack.c.b16 %v946, %v945
        %v1134 = vpack.c.b16 %v948, %v947
        %v1135 = vpack.c.b16 %v950, %v949
        %v1136 = vpack.c.b16 %v952, %v951
        %v1137 = vpack.c.b16 %v954, %v953
        %v1138 = vpack.c.b16 %v956, %v955
        %v1139 = vpack.c.b16 %v958, %v957
        %v1140 = vpack.c.b16 %v960, %v959
        %v1141 = vpack.c.b16 %v962, %v961
        %v1142 = vpack.c.b16 %v964, %v963
        %v1143 = vpack.c.b16 %v966, %v965
        %v1144 = vpack.c.b16 %v968, %v967
        %v1145 = vpack.c.b16 %v970, %v969
        %v1146 = vpack.c.b16 %v972, %v971
        %v1147 = vpack.c.b16 %v974, %v973
        %v1148 = vpack.c.b16 %v976, %v975
        %v1149 = vpack.c.b16 %v978, %v977
        %v1150 = vpack.c.b16 %v980, %v979
        %v1151 = vpack.c.b16 %v982, %v981
        %v1152 = vpack.c.b16 %v984, %v983
        %v1153 = vpack.c.b16 %v986, %v985
        %v1154 = vpack.c.b16 %v988, %v987
        %v1155 = vpack.c.b16 %v990, %v989
        %v1156 = vpack.c.b16 %v992, %v991
        %v1157 = vpack.c.b16 %v994, %v993
        %v1158 = vpack.c.b16 %v996, %v995
        %v1159 = vpack.c.b16 %v998, %v997
        %v1160 = vpack.c.b16 %v1000, %v999
        %v1161 = vpack.c.b16 %v1002, %v1001
        %v1162 = vpack.c.b16 %v1004, %v1003
        %v1163 = vpack.c.b16 %v1006, %v1005
        %v1164 = vpack.c.b16 %v1008, %v1007
        %v1165 = vpack.c.b16 %v1010, %v1009
        %v1166 = vpack.c.b16 %v1012, %v1011
        %v1167 = vpack.c.b16 %v1014, %v1013
        %v1168 = vpack.c.b16 %v1016, %v1015
        %v1169 = vpack.c.b16 %v1018, %v1017
        %v1170 = vpack.c.b16 %v1020, %v1019
        %v1171 = vpack.c.b16 %v1022, %v1021
        %v1172 = vpack.c.b16 %v1024, %v1023
        %v1173 = vpack.c.b16 %v1026, %v1025
        %v1174 = vpack.c.b16 %v1028, %v1027
        %v1175 = vpack.c.b16 %v1030, %v1029
        %v1176 = vpack.c.b16 %v1032, %v1031
        %v1177 = vpack.c.b16 %v1034, %v1033
        %v1178 = vpack.c.b16 %v1036, %v1035
        %v1179 = vpack.c.b16 %v1038, %v1037
        %v1180 = vpack.c.b16 %v1040, %v1039
        %v1181 = vpack.c.b16 %v1042, %v1041
        %v1182 = vpack.c.b16 %v1044, %v1043
        %v1183 = vpack.c.b16 %v1046, %v1045
        %v1184 = vpack.c.b16 %v1048, %v1047
        %v1185 = vpack.c.b16 %v1050, %v1049
        %v1186 = vpack.c.b16 %v1052, %v1051
        %v1187 = vpack.c.b16 %v1054, %v1053
        %v1188 = vpack.c.b16 %v1056, %v1055
        %v1189 = vpack.c.b16 %v1058, %v1057
        %v1190 = vpack.c.b16 %v1060, %v1059
        %v1191 = vpack.c.b16 %v1062, %v1061
        %v1192 = vpack.c.b16 %v1064, %v1063
        %v1337 = vunpack.c.l.b16 %v530
        %v1338 = vunpack.c.l.b16 %v531
        %v1339 = vunpack.c.l.b16 %v532
        %v1340 = vunpack.c.l.b16 %v533
        %v1341 = vunpack.c.l.b16 %v534
        %v1342 = vunpack.c.l.b16 %v535
        %v1343 = vunpack.c.l.b16 %v536
        %v1344 = vunpack.c.l.b16 %v537
        %v1345 = vunpack.c.l.b16 %v538
        %v1346 = vunpack.c.l.b16 %v539
        %v1347 = vunpack.c.l.b16 %v540
        %v1348 = vunpack.c.l.b16 %v541
        %v1349 = vunpack.c.l.b16 %v542
        %v1350 = vunpack.c.l.b16 %v543
        %v1351 = vunpack.c.l.b16 %v544
        %v1352 = vunpack.c.l.b16 %v545
        %v1353 = vpack.c.b16 %v1338, %v1337
        %v1354 = vpack.c.b16 %v1340, %v1339
        %v1355 = vpack.c.b16 %v1342, %v1341
        %v1356 = vpack.c.b16 %v1344, %v1343
        %v1357 = vpack.c.b16 %v1346, %v1345
        %v1358 = vpack.c.b16 %v1348, %v1347
        %v1359 = vpack.c.b16 %v1350, %v1349
        %v1360 = vpack.c.b16 %v1352, %v1351
        %1369 = vmatprep.subr.bf16.mxu0 0
        %1370 = vmatpush1.bf16.msra.mxu0 %v1353
        %1371 = vmatprep.subr.bf16.mxu0 0
        %1372 = vmatpush1.bf16.msra.mxu0 %v1354
        %1373 = vmatprep.subr.bf16.mxu0 0
        %1374 = vmatpush1.bf16.msra.mxu0 %v1355
        %1375 = vmatprep.subr.bf16.mxu0 0
        %1376 = vmatpush1.bf16.msra.mxu0 %v1356
        %1377 = vmatprep.subr.bf16.mxu0 0
        %1378 = vmatpush1.bf16.msra.mxu0 %v1357
        %1379 = vmatprep.subr.bf16.mxu0 0
        %1380 = vmatpush1.bf16.msra.mxu0 %v1358
        %1381 = vmatprep.subr.bf16.mxu0 0
        %1382 = vmatpush1.bf16.msra.mxu0 %v1359
        %1383 = vmatprep.subr.bf16.mxu0 0
        %1384 = vmatpush1.bf16.msra.mxu0 %v1360
        %1385 = vmatprep.subr.bf16.mxu0 0
        %1386 = vmatpush1.bf16.msra.mxu0 0
        %1387 = vmatprep.subr.bf16.mxu0 0
        %1388 = vmatpush1.bf16.msra.mxu0 0
        %1389 = vmatprep.subr.bf16.mxu0 0
        %1390 = vmatpush1.bf16.msra.mxu0 0
        %1391 = vmatprep.subr.bf16.mxu0 0
        %1392 = vmatpush1.bf16.msra.mxu0 0
        %1393 = vmatprep.subr.bf16.mxu0 0
        %1394 = vmatpush1.bf16.msra.mxu0 0
        %1395 = vmatprep.subr.bf16.mxu0 0
        %1396 = vmatpush1.bf16.msra.mxu0 0
        %1397 = vmatprep.subr.bf16.mxu0 0
        %1398 = vmatpush1.bf16.msra.mxu0 0
        %1399 = vmatprep.subr.bf16.mxu0 0
        %1400 = vmatpush1.bf16.msra.mxu0 0
        %1401 = vmatprep.mubr.bf16.mxu0 0
        %1402 = vmatmul.mubr.bf16.gmra.mrb[0].mxu0 %v1065
        %v1403 = vpop.f32.mrb[0].mxu0
        %v1404 = vadd.f32 %v551, %v1403
        %v1405 = vpop.f32.mrb[0].mxu0
        %v1406 = vpop.f32.mrb[0].mxu0
        %v1407 = vadd.f32 %v551, %v1406
        %v1408 = vpop.f32.mrb[0].mxu0
        %1409 = vmatprep.mubr.bf16.mxu0 0
        %1410 = vmatmul.mubr.bf16.gmra.mrb[0].mxu0 %v1066
        %v1411 = vpop.f32.mrb[0].mxu0
        %v1412 = vadd.f32 %v551, %v1411
        %v1413 = vpop.f32.mrb[0].mxu0
        %v1414 = vpop.f32.mrb[0].mxu0
        %v1415 = vadd.f32 %v551, %v1414
        %v1416 = vpop.f32.mrb[0].mxu0
        %1417 = vmatprep.mubr.bf16.mxu0 0
        %1418 = vmatmul.mubr.bf16.gmra.mrb[0].mxu0 %v1067
        %v1419 = vpop.f32.mrb[0].mxu0
        %v1420 = vadd.f32 %v551, %v1419
        %v1421 = vpop.f32.mrb[0].mxu0
        %v1422 = vpop.f32.mrb[0].mxu0
        %v1423 = vadd.f32 %v551, %v1422
        %v1424 = vpop.f32.mrb[0].mxu0
        %1425 = vmatprep.mubr.bf16.mxu0 0
        %1426 = vmatmul.mubr.bf16.gmra.mrb[0].mxu0 %v1068
        %v1427 = vpop.f32.mrb[0].mxu0
        %v1428 = vadd.f32 %v551, %v1427
        %v1429 = vpop.f32.mrb[0].mxu0
        %v1430 = vpop.f32.mrb[0].mxu0
        %v1431 = vadd.f32 %v551, %v1430
        %v1432 = vpop.f32.mrb[0].mxu0
        %1433 = vmatprep.mubr.bf16.mxu0 0
        %1434 = vmatmul.mubr.bf16.gmra.mrb[0].mxu0 %v1069
        %v1435 = vpop.f32.mrb[0].mxu0
        %v1436 = vadd.f32 %v551, %v1435
        %v1437 = vpop.f32.mrb[0].mxu0
        %v1438 = vpop.f32.mrb[0].mxu0
        %v1439 = vadd.f32 %v551, %v1438
        %v1440 = vpop.f32.mrb[0].mxu0
        %1441 = vmatprep.mubr.bf16.mxu0 0
        %1442 = vmatmul.mubr.bf16.gmra.mrb[0].mxu0 %v1070
        %v1443 = vpop.f32.mrb[0].mxu0
        %v1444 = vadd.f32 %v551, %v1443
        %v1445 = vpop.f32.mrb[0].mxu0
        %v1446 = vpop.f32.mrb[0].mxu0
        %v1447 = vadd.f32 %v551, %v1446
        %v1448 = vpop.f32.mrb[0].mxu0
        %1449 = vmatprep.mubr.bf16.mxu0 0
        %1450 = vmatmul.mubr.bf16.gmra.mrb[0].mxu0 %v1071
        %v1451 = vpop.f32.mrb[0].mxu0
        %v1452 = vadd.f32 %v551, %v1451
        %v1453 = vpop.f32.mrb[0].mxu0
        %v1454 = vpop.f32.mrb[0].mxu0
        %v1455 = vadd.f32 %v551, %v1454
        %v1456 = vpop.f32.mrb[0].mxu0
        %1457 = vmatprep.mubr.bf16.mxu0 0
        %1458 = vmatmul.mubr.bf16.gmra.mrb[0].mxu0 %v1072
        %v1459 = vpop.f32.mrb[0].mxu0
        %v1460 = vadd.f32 %v551, %v1459
        %v1461 = vpop.f32.mrb[0].mxu0
        %v1462 = vpop.f32.mrb[0].mxu0
        %v1463 = vadd.f32 %v551, %v1462
        %v1464 = vpop.f32.mrb[0].mxu0
        %1465 = vmatprep.mubr.bf16.mxu0 0
        %1466 = vmatmul.mubr.bf16.gmra.mrb[0].mxu0 %v1073
        %v1467 = vpop.f32.mrb[0].mxu0
        %v1468 = vadd.f32 %v551, %v1467
        %v1469 = vpop.f32.mrb[0].mxu0
        %v1470 = vpop.f32.mrb[0].mxu0
        %v1471 = vadd.f32 %v551, %v1470
        %v1472 = vpop.f32.mrb[0].mxu0
        %1473 = vmatprep.mubr.bf16.mxu0 0
        %1474 = vmatmul.mubr.bf16.gmra.mrb[0].mxu0 %v1074
        %v1475 = vpop.f32.mrb[0].mxu0
        %v1476 = vadd.f32 %v551, %v1475
        %v1477 = vpop.f32.mrb[0].mxu0
        %v1478 = vpop.f32.mrb[0].mxu0
        %v1479 = vadd.f32 %v551, %v1478
        %v1480 = vpop.f32.mrb[0].mxu0
        %1481 = vmatprep.mubr.bf16.mxu0 0
        %1482 = vmatmul.mubr.bf16.gmra.mrb[0].mxu0 %v1075
        %v1483 = vpop.f32.mrb[0].mxu0
        %v1484 = vadd.f32 %v551, %v1483
        %v1485 = vpop.f32.mrb[0].mxu0
        %v1486 = vpop.f32.mrb[0].mxu0
        %v1487 = vadd.f32 %v551, %v1486
        %v1488 = vpop.f32.mrb[0].mxu0
        %1489 = vmatprep.mubr.bf16.mxu0 0
        %1490 = vmatmul.mubr.bf16.gmra.mrb[0].mxu0 %v1076
        %v1491 = vpop.f32.mrb[0].mxu0
        %v1492 = vadd.f32 %v551, %v1491
        %v1493 = vpop.f32.mrb[0].mxu0
        %v1494 = vpop.f32.mrb[0].mxu0
        %v1495 = vadd.f32 %v551, %v1494
        %v1496 = vpop.f32.mrb[0].mxu0
        %1497 = vmatprep.mubr.bf16.mxu0 0
        %1498 = vmatmul.mubr.bf16.gmra.mrb[0].mxu0 %v1077
        %v1499 = vpop.f32.mrb[0].mxu0
        %v1500 = vadd.f32 %v551, %v1499
        %v1501 = vpop.f32.mrb[0].mxu0
        %v1502 = vpop.f32.mrb[0].mxu0
        %v1503 = vadd.f32 %v551, %v1502
        %v1504 = vpop.f32.mrb[0].mxu0
        %1505 = vmatprep.mubr.bf16.mxu0 0
        %1506 = vmatmul.mubr.bf16.gmra.mrb[0].mxu0 %v1078
        %v1507 = vpop.f32.mrb[0].mxu0
        %v1508 = vadd.f32 %v551, %v1507
        %v1509 = vpop.f32.mrb[0].mxu0
        %v1510 = vpop.f32.mrb[0].mxu0
        %v1511 = vadd.f32 %v551, %v1510
        %v1512 = vpop.f32.mrb[0].mxu0
        %1513 = vmatprep.mubr.bf16.mxu0 0
        %1514 = vmatmul.mubr.bf16.gmra.mrb[0].mxu0 %v1079
        %v1515 = vpop.f32.mrb[0].mxu0
        %v1516 = vadd.f32 %v551, %v1515
        %v1517 = vpop.f32.mrb[0].mxu0
        %v1518 = vpop.f32.mrb[0].mxu0
        %v1519 = vadd.f32 %v551, %v1518
        %v1520 = vpop.f32.mrb[0].mxu0
        %1521 = vmatprep.mubr.bf16.mxu0 0
        %1522 = vmatmul.mubr.bf16.gmra.mrb[0].mxu0 %v1080
        %v1523 = vpop.f32.mrb[0].mxu0
        %v1524 = vadd.f32 %v551, %v1523
        %v1525 = vpop.f32.mrb[0].mxu0
        %v1526 = vpop.f32.mrb[0].mxu0
        %v1527 = vadd.f32 %v551, %v1526
        %v1528 = vpop.f32.mrb[0].mxu0
        %1529 = vmatprep.mubr.bf16.mxu0 0
        %1530 = vmatmul.mubr.bf16.gmra.mrb[0].mxu0 %v1081
        %v1531 = vpop.f32.mrb[0].mxu0
        %v1532 = vadd.f32 %v551, %v1531
        %v1533 = vpop.f32.mrb[0].mxu0
        %v1534 = vpop.f32.mrb[0].mxu0
        %v1535 = vadd.f32 %v551, %v1534
        %v1536 = vpop.f32.mrb[0].mxu0
        %1537 = vmatprep.mubr.bf16.mxu0 0
        %1538 = vmatmul.mubr.bf16.gmra.mrb[0].mxu0 %v1082
        %v1539 = vpop.f32.mrb[0].mxu0
        %v1540 = vadd.f32 %v551, %v1539
        %v1541 = vpop.f32.mrb[0].mxu0
        %v1542 = vpop.f32.mrb[0].mxu0
        %v1543 = vadd.f32 %v551, %v1542
        %v1544 = vpop.f32.mrb[0].mxu0
        %1545 = vmatprep.mubr.bf16.mxu0 0
        %1546 = vmatmul.mubr.bf16.gmra.mrb[0].mxu0 %v1083
        %v1547 = vpop.f32.mrb[0].mxu0
        %v1548 = vadd.f32 %v551, %v1547
        %v1549 = vpop.f32.mrb[0].mxu0
        %v1550 = vpop.f32.mrb[0].mxu0
        %v1551 = vadd.f32 %v551, %v1550
        %v1552 = vpop.f32.mrb[0].mxu0
        %1553 = vmatprep.mubr.bf16.mxu0 0
        %1554 = vmatmul.mubr.bf16.gmra.mrb[0].mxu0 %v1084
        %v1555 = vpop.f32.mrb[0].mxu0
        %v1556 = vadd.f32 %v551, %v1555
        %v1557 = vpop.f32.mrb[0].mxu0
        %v1558 = vpop.f32.mrb[0].mxu0
        %v1559 = vadd.f32 %v551, %v1558
        %v1560 = vpop.f32.mrb[0].mxu0
        %1561 = vmatprep.mubr.bf16.mxu0 0
        %1562 = vmatmul.mubr.bf16.gmra.mrb[0].mxu0 %v1085
        %v1563 = vpop.f32.mrb[0].mxu0
        %v1564 = vadd.f32 %v551, %v1563
        %v1565 = vpop.f32.mrb[0].mxu0
        %v1566 = vpop.f32.mrb[0].mxu0
        %v1567 = vadd.f32 %v551, %v1566
        %v1568 = vpop.f32.mrb[0].mxu0
        %1569 = vmatprep.mubr.bf16.mxu0 0
        %1570 = vmatmul.mubr.bf16.gmra.mrb[0].mxu0 %v1086
        %v1571 = vpop.f32.mrb[0].mxu0
        %v1572 = vadd.f32 %v551, %v1571
        %v1573 = vpop.f32.mrb[0].mxu0
        %v1574 = vpop.f32.mrb[0].mxu0
        %v1575 = vadd.f32 %v551, %v1574
        %v1576 = vpop.f32.mrb[0].mxu0
        %1577 = vmatprep.mubr.bf16.mxu0 0
        %1578 = vmatmul.mubr.bf16.gmra.mrb[0].mxu0 %v1087
        %v1579 = vpop.f32.mrb[0].mxu0
        %v1580 = vadd.f32 %v551, %v1579
        %v1581 = vpop.f32.mrb[0].mxu0
        %v1582 = vpop.f32.mrb[0].mxu0
        %v1583 = vadd.f32 %v551, %v1582
        %v1584 = vpop.f32.mrb[0].mxu0
        %1585 = vmatprep.mubr.bf16.mxu0 0
        %1586 = vmatmul.mubr.bf16.gmra.mrb[0].mxu0 %v1088
        %v1587 = vpop.f32.mrb[0].mxu0
        %v1588 = vadd.f32 %v551, %v1587
        %v1589 = vpop.f32.mrb[0].mxu0
        %v1590 = vpop.f32.mrb[0].mxu0
        %v1591 = vadd.f32 %v551, %v1590
        %v1592 = vpop.f32.mrb[0].mxu0
        %1593 = vmatprep.mubr.bf16.mxu0 0
        %1594 = vmatmul.mubr.bf16.gmra.mrb[0].mxu0 %v1089
        %v1595 = vpop.f32.mrb[0].mxu0
        %v1596 = vadd.f32 %v551, %v1595
        %v1597 = vpop.f32.mrb[0].mxu0
        %v1598 = vpop.f32.mrb[0].mxu0
        %v1599 = vadd.f32 %v551, %v1598
        %v1600 = vpop.f32.mrb[0].mxu0
        %1601 = vmatprep.mubr.bf16.mxu0 0
        %1602 = vmatmul.mubr.bf16.gmra.mrb[0].mxu0 %v1090
        %v1603 = vpop.f32.mrb[0].mxu0
        %v1604 = vadd.f32 %v551, %v1603
        %v1605 = vpop.f32.mrb[0].mxu0
        %v1606 = vpop.f32.mrb[0].mxu0
        %v1607 = vadd.f32 %v551, %v1606
        %v1608 = vpop.f32.mrb[0].mxu0
        %1609 = vmatprep.mubr.bf16.mxu0 0
        %1610 = vmatmul.mubr.bf16.gmra.mrb[0].mxu0 %v1091
        %v1611 = vpop.f32.mrb[0].mxu0
        %v1612 = vadd.f32 %v551, %v1611
        %v1613 = vpop.f32.mrb[0].mxu0
        %v1614 = vpop.f32.mrb[0].mxu0
        %v1615 = vadd.f32 %v551, %v1614
        %v1616 = vpop.f32.mrb[0].mxu0
        %1617 = vmatprep.mubr.bf16.mxu0 0
        %1618 = vmatmul.mubr.bf16.gmra.mrb[0].mxu0 %v1092
        %v1619 = vpop.f32.mrb[0].mxu0
        %v1620 = vadd.f32 %v551, %v1619
        %v1621 = vpop.f32.mrb[0].mxu0
        %v1622 = vpop.f32.mrb[0].mxu0
        %v1623 = vadd.f32 %v551, %v1622
        %v1624 = vpop.f32.mrb[0].mxu0
        %1625 = vmatprep.mubr.bf16.mxu0 0
        %1626 = vmatmul.mubr.bf16.gmra.mrb[0].mxu0 %v1093
        %v1627 = vpop.f32.mrb[0].mxu0
        %v1628 = vadd.f32 %v551, %v1627
        %v1629 = vpop.f32.mrb[0].mxu0
        %v1630 = vpop.f32.mrb[0].mxu0
        %v1631 = vadd.f32 %v551, %v1630
        %v1632 = vpop.f32.mrb[0].mxu0
        %1633 = vmatprep.mubr.bf16.mxu0 0
        %1634 = vmatmul.mubr.bf16.gmra.mrb[0].mxu0 %v1094
        %v1635 = vpop.f32.mrb[0].mxu0
        %v1636 = vadd.f32 %v551, %v1635
        %v1637 = vpop.f32.mrb[0].mxu0
        %v1638 = vpop.f32.mrb[0].mxu0
        %v1639 = vadd.f32 %v551, %v1638
        %v1640 = vpop.f32.mrb[0].mxu0
        %1641 = vmatprep.mubr.bf16.mxu0 0
        %1642 = vmatmul.mubr.bf16.gmra.mrb[0].mxu0 %v1095
        %v1643 = vpop.f32.mrb[0].mxu0
        %v1644 = vadd.f32 %v551, %v1643
        %v1645 = vpop.f32.mrb[0].mxu0
        %v1646 = vpop.f32.mrb[0].mxu0
        %v1647 = vadd.f32 %v551, %v1646
        %v1648 = vpop.f32.mrb[0].mxu0
        %1649 = vmatprep.mubr.bf16.mxu0 0
        %1650 = vmatmul.mubr.bf16.gmra.mrb[0].mxu0 %v1096
        %v1651 = vpop.f32.mrb[0].mxu0
        %v1652 = vadd.f32 %v551, %v1651
        %v1653 = vpop.f32.mrb[0].mxu0
        %v1654 = vpop.f32.mrb[0].mxu0
        %v1655 = vadd.f32 %v551, %v1654
        %v1656 = vpop.f32.mrb[0].mxu0
        %1657 = vmatprep.mubr.bf16.mxu0 0
        %1658 = vmatmul.mubr.bf16.gmra.mrb[0].mxu0 %v1097
        %v1659 = vpop.f32.mrb[0].mxu0
        %v1660 = vadd.f32 %v551, %v1659
        %v1661 = vpop.f32.mrb[0].mxu0
        %v1662 = vpop.f32.mrb[0].mxu0
        %v1663 = vadd.f32 %v551, %v1662
        %v1664 = vpop.f32.mrb[0].mxu0
        %1665 = vmatprep.mubr.bf16.mxu0 0
        %1666 = vmatmul.mubr.bf16.gmra.mrb[0].mxu0 %v1098
        %v1667 = vpop.f32.mrb[0].mxu0
        %v1668 = vadd.f32 %v551, %v1667
        %v1669 = vpop.f32.mrb[0].mxu0
        %v1670 = vpop.f32.mrb[0].mxu0
        %v1671 = vadd.f32 %v551, %v1670
        %v1672 = vpop.f32.mrb[0].mxu0
        %1673 = vmatprep.mubr.bf16.mxu0 0
        %1674 = vmatmul.mubr.bf16.gmra.mrb[0].mxu0 %v1099
        %v1675 = vpop.f32.mrb[0].mxu0
        %v1676 = vadd.f32 %v551, %v1675
        %v1677 = vpop.f32.mrb[0].mxu0
        %v1678 = vpop.f32.mrb[0].mxu0
        %v1679 = vadd.f32 %v551, %v1678
        %v1680 = vpop.f32.mrb[0].mxu0
        %1681 = vmatprep.mubr.bf16.mxu0 0
        %1682 = vmatmul.mubr.bf16.gmra.mrb[0].mxu0 %v1100
        %v1683 = vpop.f32.mrb[0].mxu0
        %v1684 = vadd.f32 %v551, %v1683
        %v1685 = vpop.f32.mrb[0].mxu0
        %v1686 = vpop.f32.mrb[0].mxu0
        %v1687 = vadd.f32 %v551, %v1686
        %v1688 = vpop.f32.mrb[0].mxu0
        %1689 = vmatprep.mubr.bf16.mxu0 0
        %1690 = vmatmul.mubr.bf16.gmra.mrb[0].mxu0 %v1101
        %v1691 = vpop.f32.mrb[0].mxu0
        %v1692 = vadd.f32 %v551, %v1691
        %v1693 = vpop.f32.mrb[0].mxu0
        %v1694 = vpop.f32.mrb[0].mxu0
        %v1695 = vadd.f32 %v551, %v1694
        %v1696 = vpop.f32.mrb[0].mxu0
        %1697 = vmatprep.mubr.bf16.mxu0 0
        %1698 = vmatmul.mubr.bf16.gmra.mrb[0].mxu0 %v1102
        %v1699 = vpop.f32.mrb[0].mxu0
        %v1700 = vadd.f32 %v551, %v1699
        %v1701 = vpop.f32.mrb[0].mxu0
        %v1702 = vpop.f32.mrb[0].mxu0
        %v1703 = vadd.f32 %v551, %v1702
        %v1704 = vpop.f32.mrb[0].mxu0
        %1705 = vmatprep.mubr.bf16.mxu0 0
        %1706 = vmatmul.mubr.bf16.gmra.mrb[0].mxu0 %v1103
        %v1707 = vpop.f32.mrb[0].mxu0
        %v1708 = vadd.f32 %v551, %v1707
        %v1709 = vpop.f32.mrb[0].mxu0
        %v1710 = vpop.f32.mrb[0].mxu0
        %v1711 = vadd.f32 %v551, %v1710
        %v1712 = vpop.f32.mrb[0].mxu0
        %1713 = vmatprep.mubr.bf16.mxu0 0
        %1714 = vmatmul.mubr.bf16.gmra.mrb[0].mxu0 %v1104
        %v1715 = vpop.f32.mrb[0].mxu0
        %v1716 = vadd.f32 %v551, %v1715
        %v1717 = vpop.f32.mrb[0].mxu0
        %v1718 = vpop.f32.mrb[0].mxu0
        %v1719 = vadd.f32 %v551, %v1718
        %v1720 = vpop.f32.mrb[0].mxu0
        %1721 = vmatprep.mubr.bf16.mxu0 0
        %1722 = vmatmul.mubr.bf16.gmra.mrb[0].mxu0 %v1105
        %v1723 = vpop.f32.mrb[0].mxu0
        %v1724 = vadd.f32 %v551, %v1723
        %v1725 = vpop.f32.mrb[0].mxu0
        %v1726 = vpop.f32.mrb[0].mxu0
        %v1727 = vadd.f32 %v551, %v1726
        %v1728 = vpop.f32.mrb[0].mxu0
        %1729 = vmatprep.mubr.bf16.mxu0 0
        %1730 = vmatmul.mubr.bf16.gmra.mrb[0].mxu0 %v1106
        %v1731 = vpop.f32.mrb[0].mxu0
        %v1732 = vadd.f32 %v551, %v1731
        %v1733 = vpop.f32.mrb[0].mxu0
        %v1734 = vpop.f32.mrb[0].mxu0
        %v1735 = vadd.f32 %v551, %v1734
        %v1736 = vpop.f32.mrb[0].mxu0
        %1737 = vmatprep.mubr.bf16.mxu0 0
        %1738 = vmatmul.mubr.bf16.gmra.mrb[0].mxu0 %v1107
        %v1739 = vpop.f32.mrb[0].mxu0
        %v1740 = vadd.f32 %v551, %v1739
        %v1741 = vpop.f32.mrb[0].mxu0
        %v1742 = vpop.f32.mrb[0].mxu0
        %v1743 = vadd.f32 %v551, %v1742
        %v1744 = vpop.f32.mrb[0].mxu0
        %1745 = vmatprep.mubr.bf16.mxu0 0
        %1746 = vmatmul.mubr.bf16.gmra.mrb[0].mxu0 %v1108
        %v1747 = vpop.f32.mrb[0].mxu0
        %v1748 = vadd.f32 %v551, %v1747
        %v1749 = vpop.f32.mrb[0].mxu0
        %v1750 = vpop.f32.mrb[0].mxu0
        %v1751 = vadd.f32 %v551, %v1750
        %v1752 = vpop.f32.mrb[0].mxu0
        %1753 = vmatprep.mubr.bf16.mxu0 0
        %1754 = vmatmul.mubr.bf16.gmra.mrb[0].mxu0 %v1109
        %v1755 = vpop.f32.mrb[0].mxu0
        %v1756 = vadd.f32 %v551, %v1755
        %v1757 = vpop.f32.mrb[0].mxu0
        %v1758 = vpop.f32.mrb[0].mxu0
        %v1759 = vadd.f32 %v551, %v1758
        %v1760 = vpop.f32.mrb[0].mxu0
        %1761 = vmatprep.mubr.bf16.mxu0 0
        %1762 = vmatmul.mubr.bf16.gmra.mrb[0].mxu0 %v1110
        %v1763 = vpop.f32.mrb[0].mxu0
        %v1764 = vadd.f32 %v551, %v1763
        %v1765 = vpop.f32.mrb[0].mxu0
        %v1766 = vpop.f32.mrb[0].mxu0
        %v1767 = vadd.f32 %v551, %v1766
        %v1768 = vpop.f32.mrb[0].mxu0
        %1769 = vmatprep.mubr.bf16.mxu0 0
        %1770 = vmatmul.mubr.bf16.gmra.mrb[0].mxu0 %v1111
        %v1771 = vpop.f32.mrb[0].mxu0
        %v1772 = vadd.f32 %v551, %v1771
        %v1773 = vpop.f32.mrb[0].mxu0
        %v1774 = vpop.f32.mrb[0].mxu0
        %v1775 = vadd.f32 %v551, %v1774
        %v1776 = vpop.f32.mrb[0].mxu0
        %1777 = vmatprep.mubr.bf16.mxu0 0
        %1778 = vmatmul.mubr.bf16.gmra.mrb[0].mxu0 %v1112
        %v1779 = vpop.f32.mrb[0].mxu0
        %v1780 = vadd.f32 %v551, %v1779
        %v1781 = vpop.f32.mrb[0].mxu0
        %v1782 = vpop.f32.mrb[0].mxu0
        %v1783 = vadd.f32 %v551, %v1782
        %v1784 = vpop.f32.mrb[0].mxu0
        %1785 = vmatprep.mubr.bf16.mxu0 0
        %1786 = vmatmul.mubr.bf16.gmra.mrb[0].mxu0 %v1113
        %v1787 = vpop.f32.mrb[0].mxu0
        %v1788 = vadd.f32 %v551, %v1787
        %v1789 = vpop.f32.mrb[0].mxu0
        %v1790 = vpop.f32.mrb[0].mxu0
        %v1791 = vadd.f32 %v551, %v1790
        %v1792 = vpop.f32.mrb[0].mxu0
        %1793 = vmatprep.mubr.bf16.mxu0 0
        %1794 = vmatmul.mubr.bf16.gmra.mrb[0].mxu0 %v1114
        %v1795 = vpop.f32.mrb[0].mxu0
        %v1796 = vadd.f32 %v551, %v1795
        %v1797 = vpop.f32.mrb[0].mxu0
        %v1798 = vpop.f32.mrb[0].mxu0
        %v1799 = vadd.f32 %v551, %v1798
        %v1800 = vpop.f32.mrb[0].mxu0
        %1801 = vmatprep.mubr.bf16.mxu0 0
        %1802 = vmatmul.mubr.bf16.gmra.mrb[0].mxu0 %v1115
        %v1803 = vpop.f32.mrb[0].mxu0
        %v1804 = vadd.f32 %v551, %v1803
        %v1805 = vpop.f32.mrb[0].mxu0
        %v1806 = vpop.f32.mrb[0].mxu0
        %v1807 = vadd.f32 %v551, %v1806
        %v1808 = vpop.f32.mrb[0].mxu0
        %1809 = vmatprep.mubr.bf16.mxu0 0
        %1810 = vmatmul.mubr.bf16.gmra.mrb[0].mxu0 %v1116
        %v1811 = vpop.f32.mrb[0].mxu0
        %v1812 = vadd.f32 %v551, %v1811
        %v1813 = vpop.f32.mrb[0].mxu0
        %v1814 = vpop.f32.mrb[0].mxu0
        %v1815 = vadd.f32 %v551, %v1814
        %v1816 = vpop.f32.mrb[0].mxu0
        %1817 = vmatprep.mubr.bf16.mxu0 0
        %1818 = vmatmul.mubr.bf16.gmra.mrb[0].mxu0 %v1117
        %v1819 = vpop.f32.mrb[0].mxu0
        %v1820 = vadd.f32 %v551, %v1819
        %v1821 = vpop.f32.mrb[0].mxu0
        %v1822 = vpop.f32.mrb[0].mxu0
        %v1823 = vadd.f32 %v551, %v1822
        %v1824 = vpop.f32.mrb[0].mxu0
        %1825 = vmatprep.mubr.bf16.mxu0 0
        %1826 = vmatmul.mubr.bf16.gmra.mrb[0].mxu0 %v1118
        %v1827 = vpop.f32.mrb[0].mxu0
        %v1828 = vadd.f32 %v551, %v1827
        %v1829 = vpop.f32.mrb[0].mxu0
        %v1830 = vpop.f32.mrb[0].mxu0
        %v1831 = vadd.f32 %v551, %v1830
        %v1832 = vpop.f32.mrb[0].mxu0
        %1833 = vmatprep.mubr.bf16.mxu0 0
        %1834 = vmatmul.mubr.bf16.gmra.mrb[0].mxu0 %v1119
        %v1835 = vpop.f32.mrb[0].mxu0
        %v1836 = vadd.f32 %v551, %v1835
        %v1837 = vpop.f32.mrb[0].mxu0
        %v1838 = vpop.f32.mrb[0].mxu0
        %v1839 = vadd.f32 %v551, %v1838
        %v1840 = vpop.f32.mrb[0].mxu0
        %1841 = vmatprep.mubr.bf16.mxu0 0
        %1842 = vmatmul.mubr.bf16.gmra.mrb[0].mxu0 %v1120
        %v1843 = vpop.f32.mrb[0].mxu0
        %v1844 = vadd.f32 %v551, %v1843
        %v1845 = vpop.f32.mrb[0].mxu0
        %v1846 = vpop.f32.mrb[0].mxu0
        %v1847 = vadd.f32 %v551, %v1846
        %v1848 = vpop.f32.mrb[0].mxu0
        %1849 = vmatprep.mubr.bf16.mxu0 0
        %1850 = vmatmul.mubr.bf16.gmra.mrb[0].mxu0 %v1121
        %v1851 = vpop.f32.mrb[0].mxu0
        %v1852 = vadd.f32 %v551, %v1851
        %v1853 = vpop.f32.mrb[0].mxu0
        %v1854 = vpop.f32.mrb[0].mxu0
        %v1855 = vadd.f32 %v551, %v1854
        %v1856 = vpop.f32.mrb[0].mxu0
        %1857 = vmatprep.mubr.bf16.mxu0 0
        %1858 = vmatmul.mubr.bf16.gmra.mrb[0].mxu0 %v1122
        %v1859 = vpop.f32.mrb[0].mxu0
        %v1860 = vadd.f32 %v551, %v1859
        %v1861 = vpop.f32.mrb[0].mxu0
        %v1862 = vpop.f32.mrb[0].mxu0
        %v1863 = vadd.f32 %v551, %v1862
        %v1864 = vpop.f32.mrb[0].mxu0
        %1865 = vmatprep.mubr.bf16.mxu0 0
        %1866 = vmatmul.mubr.bf16.gmra.mrb[0].mxu0 %v1123
        %v1867 = vpop.f32.mrb[0].mxu0
        %v1868 = vadd.f32 %v551, %v1867
        %v1869 = vpop.f32.mrb[0].mxu0
        %v1870 = vpop.f32.mrb[0].mxu0
        %v1871 = vadd.f32 %v551, %v1870
        %v1872 = vpop.f32.mrb[0].mxu0
        %1873 = vmatprep.mubr.bf16.mxu0 0
        %1874 = vmatmul.mubr.bf16.gmra.mrb[0].mxu0 %v1124
        %v1875 = vpop.f32.mrb[0].mxu0
        %v1876 = vadd.f32 %v551, %v1875
        %v1877 = vpop.f32.mrb[0].mxu0
        %v1878 = vpop.f32.mrb[0].mxu0
        %v1879 = vadd.f32 %v551, %v1878
        %v1880 = vpop.f32.mrb[0].mxu0
        %1881 = vmatprep.mubr.bf16.mxu0 0
        %1882 = vmatmul.mubr.bf16.gmra.mrb[0].mxu0 %v1125
        %v1883 = vpop.f32.mrb[0].mxu0
        %v1884 = vadd.f32 %v551, %v1883
        %v1885 = vpop.f32.mrb[0].mxu0
        %v1886 = vpop.f32.mrb[0].mxu0
        %v1887 = vadd.f32 %v551, %v1886
        %v1888 = vpop.f32.mrb[0].mxu0
        %1889 = vmatprep.mubr.bf16.mxu0 0
        %1890 = vmatmul.mubr.bf16.gmra.mrb[0].mxu0 %v1126
        %v1891 = vpop.f32.mrb[0].mxu0
        %v1892 = vadd.f32 %v551, %v1891
        %v1893 = vpop.f32.mrb[0].mxu0
        %v1894 = vpop.f32.mrb[0].mxu0
        %v1895 = vadd.f32 %v551, %v1894
        %v1896 = vpop.f32.mrb[0].mxu0
        %1897 = vmatprep.mubr.bf16.mxu0 0
        %1898 = vmatmul.mubr.bf16.gmra.mrb[0].mxu0 %v1127
        %v1899 = vpop.f32.mrb[0].mxu0
        %v1900 = vadd.f32 %v551, %v1899
        %v1901 = vpop.f32.mrb[0].mxu0
        %v1902 = vpop.f32.mrb[0].mxu0
        %v1903 = vadd.f32 %v551, %v1902
        %v1904 = vpop.f32.mrb[0].mxu0
        %1905 = vmatprep.mubr.bf16.mxu0 0
        %1906 = vmatmul.mubr.bf16.gmra.mrb[0].mxu0 %v1128
        %v1907 = vpop.f32.mrb[0].mxu0
        %v1908 = vadd.f32 %v551, %v1907
        %v1909 = vpop.f32.mrb[0].mxu0
        %v1910 = vpop.f32.mrb[0].mxu0
        %v1911 = vadd.f32 %v551, %v1910
        %v1912 = vpop.f32.mrb[0].mxu0
        %1913 = vmatprep.mubr.bf16.mxu0 0
        %1914 = vmatmul.mubr.bf16.gmra.mrb[0].mxu0 %v1129
        %v1915 = vpop.f32.mrb[0].mxu0
        %v1916 = vadd.f32 %v551, %v1915
        %v1917 = vpop.f32.mrb[0].mxu0
        %v1918 = vpop.f32.mrb[0].mxu0
        %v1919 = vadd.f32 %v551, %v1918
        %v1920 = vpop.f32.mrb[0].mxu0
        %1921 = vmatprep.mubr.bf16.mxu0 0
        %1922 = vmatmul.mubr.bf16.gmra.mrb[0].mxu0 %v1130
        %v1923 = vpop.f32.mrb[0].mxu0
        %v1924 = vadd.f32 %v551, %v1923
        %v1925 = vpop.f32.mrb[0].mxu0
        %v1926 = vpop.f32.mrb[0].mxu0
        %v1927 = vadd.f32 %v551, %v1926
        %v1928 = vpop.f32.mrb[0].mxu0
        %1929 = vmatprep.mubr.bf16.mxu0 0
        %1930 = vmatmul.mubr.bf16.gmra.mrb[0].mxu0 %v1131
        %v1931 = vpop.f32.mrb[0].mxu0
        %v1932 = vadd.f32 %v551, %v1931
        %v1933 = vpop.f32.mrb[0].mxu0
        %v1934 = vpop.f32.mrb[0].mxu0
        %v1935 = vadd.f32 %v551, %v1934
        %v1936 = vpop.f32.mrb[0].mxu0
        %1937 = vmatprep.mubr.bf16.mxu0 0
        %1938 = vmatmul.mubr.bf16.gmra.mrb[0].mxu0 %v1132
        %v1939 = vpop.f32.mrb[0].mxu0
        %v1940 = vadd.f32 %v551, %v1939
        %v1941 = vpop.f32.mrb[0].mxu0
        %v1942 = vpop.f32.mrb[0].mxu0
        %v1943 = vadd.f32 %v551, %v1942
        %v1944 = vpop.f32.mrb[0].mxu0
        %1945 = vmatprep.mubr.bf16.mxu0 0
        %1946 = vmatmul.mubr.bf16.gmra.mrb[0].mxu0 %v1133
        %v1947 = vpop.f32.mrb[0].mxu0
        %v1948 = vadd.f32 %v551, %v1947
        %v1949 = vpop.f32.mrb[0].mxu0
        %v1950 = vpop.f32.mrb[0].mxu0
        %v1951 = vadd.f32 %v551, %v1950
        %v1952 = vpop.f32.mrb[0].mxu0
        %1953 = vmatprep.mubr.bf16.mxu0 0
        %1954 = vmatmul.mubr.bf16.gmra.mrb[0].mxu0 %v1134
        %v1955 = vpop.f32.mrb[0].mxu0
        %v1956 = vadd.f32 %v551, %v1955
        %v1957 = vpop.f32.mrb[0].mxu0
        %v1958 = vpop.f32.mrb[0].mxu0
        %v1959 = vadd.f32 %v551, %v1958
        %v1960 = vpop.f32.mrb[0].mxu0
        %1961 = vmatprep.mubr.bf16.mxu0 0
        %1962 = vmatmul.mubr.bf16.gmra.mrb[0].mxu0 %v1135
        %v1963 = vpop.f32.mrb[0].mxu0
        %v1964 = vadd.f32 %v551, %v1963
        %v1965 = vpop.f32.mrb[0].mxu0
        %v1966 = vpop.f32.mrb[0].mxu0
        %v1967 = vadd.f32 %v551, %v1966
        %v1968 = vpop.f32.mrb[0].mxu0
        %1969 = vmatprep.mubr.bf16.mxu0 0
        %1970 = vmatmul.mubr.bf16.gmra.mrb[0].mxu0 %v1136
        %v1971 = vpop.f32.mrb[0].mxu0
        %v1972 = vadd.f32 %v551, %v1971
        %v1973 = vpop.f32.mrb[0].mxu0
        %v1974 = vpop.f32.mrb[0].mxu0
        %v1975 = vadd.f32 %v551, %v1974
        %v1976 = vpop.f32.mrb[0].mxu0
        %1977 = vmatprep.mubr.bf16.mxu0 0
        %1978 = vmatmul.mubr.bf16.gmra.mrb[0].mxu0 %v1137
        %v1979 = vpop.f32.mrb[0].mxu0
        %v1980 = vadd.f32 %v551, %v1979
        %v1981 = vpop.f32.mrb[0].mxu0
        %v1982 = vpop.f32.mrb[0].mxu0
        %v1983 = vadd.f32 %v551, %v1982
        %v1984 = vpop.f32.mrb[0].mxu0
        %1985 = vmatprep.mubr.bf16.mxu0 0
        %1986 = vmatmul.mubr.bf16.gmra.mrb[0].mxu0 %v1138
        %v1987 = vpop.f32.mrb[0].mxu0
        %v1988 = vadd.f32 %v551, %v1987
        %v1989 = vpop.f32.mrb[0].mxu0
        %v1990 = vpop.f32.mrb[0].mxu0
        %v1991 = vadd.f32 %v551, %v1990
        %v1992 = vpop.f32.mrb[0].mxu0
        %1993 = vmatprep.mubr.bf16.mxu0 0
        %1994 = vmatmul.mubr.bf16.gmra.mrb[0].mxu0 %v1139
        %v1995 = vpop.f32.mrb[0].mxu0
        %v1996 = vadd.f32 %v551, %v1995
        %v1997 = vpop.f32.mrb[0].mxu0
        %v1998 = vpop.f32.mrb[0].mxu0
        %v1999 = vadd.f32 %v551, %v1998
        %v2000 = vpop.f32.mrb[0].mxu0
        %2001 = vmatprep.mubr.bf16.mxu0 0
        %2002 = vmatmul.mubr.bf16.gmra.mrb[0].mxu0 %v1140
        %v2003 = vpop.f32.mrb[0].mxu0
        %v2004 = vadd.f32 %v551, %v2003
        %v2005 = vpop.f32.mrb[0].mxu0
        %v2006 = vpop.f32.mrb[0].mxu0
        %v2007 = vadd.f32 %v551, %v2006
        %v2008 = vpop.f32.mrb[0].mxu0
        %2009 = vmatprep.mubr.bf16.mxu0 0
        %2010 = vmatmul.mubr.bf16.gmra.mrb[0].mxu0 %v1141
        %v2011 = vpop.f32.mrb[0].mxu0
        %v2012 = vadd.f32 %v551, %v2011
        %v2013 = vpop.f32.mrb[0].mxu0
        %v2014 = vpop.f32.mrb[0].mxu0
        %v2015 = vadd.f32 %v551, %v2014
        %v2016 = vpop.f32.mrb[0].mxu0
        %2017 = vmatprep.mubr.bf16.mxu0 0
        %2018 = vmatmul.mubr.bf16.gmra.mrb[0].mxu0 %v1142
        %v2019 = vpop.f32.mrb[0].mxu0
        %v2020 = vadd.f32 %v551, %v2019
        %v2021 = vpop.f32.mrb[0].mxu0
        %v2022 = vpop.f32.mrb[0].mxu0
        %v2023 = vadd.f32 %v551, %v2022
        %v2024 = vpop.f32.mrb[0].mxu0
        %2025 = vmatprep.mubr.bf16.mxu0 0
        %2026 = vmatmul.mubr.bf16.gmra.mrb[0].mxu0 %v1143
        %v2027 = vpop.f32.mrb[0].mxu0
        %v2028 = vadd.f32 %v551, %v2027
        %v2029 = vpop.f32.mrb[0].mxu0
        %v2030 = vpop.f32.mrb[0].mxu0
        %v2031 = vadd.f32 %v551, %v2030
        %v2032 = vpop.f32.mrb[0].mxu0
        %2033 = vmatprep.mubr.bf16.mxu0 0
        %2034 = vmatmul.mubr.bf16.gmra.mrb[0].mxu0 %v1144
        %v2035 = vpop.f32.mrb[0].mxu0
        %v2036 = vadd.f32 %v551, %v2035
        %v2037 = vpop.f32.mrb[0].mxu0
        %v2038 = vpop.f32.mrb[0].mxu0
        %v2039 = vadd.f32 %v551, %v2038
        %v2040 = vpop.f32.mrb[0].mxu0
        %2041 = vmatprep.mubr.bf16.mxu0 0
        %2042 = vmatmul.mubr.bf16.gmra.mrb[0].mxu0 %v1145
        %v2043 = vpop.f32.mrb[0].mxu0
        %v2044 = vadd.f32 %v551, %v2043
        %v2045 = vpop.f32.mrb[0].mxu0
        %v2046 = vpop.f32.mrb[0].mxu0
        %v2047 = vadd.f32 %v551, %v2046
        %v2048 = vpop.f32.mrb[0].mxu0
        %2049 = vmatprep.mubr.bf16.mxu0 0
        %2050 = vmatmul.mubr.bf16.gmra.mrb[0].mxu0 %v1146
        %v2051 = vpop.f32.mrb[0].mxu0
        %v2052 = vadd.f32 %v551, %v2051
        %v2053 = vpop.f32.mrb[0].mxu0
        %v2054 = vpop.f32.mrb[0].mxu0
        %v2055 = vadd.f32 %v551, %v2054
        %v2056 = vpop.f32.mrb[0].mxu0
        %2057 = vmatprep.mubr.bf16.mxu0 0
        %2058 = vmatmul.mubr.bf16.gmra.mrb[0].mxu0 %v1147
        %v2059 = vpop.f32.mrb[0].mxu0
        %v2060 = vadd.f32 %v551, %v2059
        %v2061 = vpop.f32.mrb[0].mxu0
        %v2062 = vpop.f32.mrb[0].mxu0
        %v2063 = vadd.f32 %v551, %v2062
        %v2064 = vpop.f32.mrb[0].mxu0
        %2065 = vmatprep.mubr.bf16.mxu0 0
        %2066 = vmatmul.mubr.bf16.gmra.mrb[0].mxu0 %v1148
        %v2067 = vpop.f32.mrb[0].mxu0
        %v2068 = vadd.f32 %v551, %v2067
        %v2069 = vpop.f32.mrb[0].mxu0
        %v2070 = vpop.f32.mrb[0].mxu0
        %v2071 = vadd.f32 %v551, %v2070
        %v2072 = vpop.f32.mrb[0].mxu0
        %2073 = vmatprep.mubr.bf16.mxu0 0
        %2074 = vmatmul.mubr.bf16.gmra.mrb[0].mxu0 %v1149
        %v2075 = vpop.f32.mrb[0].mxu0
        %v2076 = vadd.f32 %v551, %v2075
        %v2077 = vpop.f32.mrb[0].mxu0
        %v2078 = vpop.f32.mrb[0].mxu0
        %v2079 = vadd.f32 %v551, %v2078
        %v2080 = vpop.f32.mrb[0].mxu0
        %2081 = vmatprep.mubr.bf16.mxu0 0
        %2082 = vmatmul.mubr.bf16.gmra.mrb[0].mxu0 %v1150
        %v2083 = vpop.f32.mrb[0].mxu0
        %v2084 = vadd.f32 %v551, %v2083
        %v2085 = vpop.f32.mrb[0].mxu0
        %v2086 = vpop.f32.mrb[0].mxu0
        %v2087 = vadd.f32 %v551, %v2086
        %v2088 = vpop.f32.mrb[0].mxu0
        %2089 = vmatprep.mubr.bf16.mxu0 0
        %2090 = vmatmul.mubr.bf16.gmra.mrb[0].mxu0 %v1151
        %v2091 = vpop.f32.mrb[0].mxu0
        %v2092 = vadd.f32 %v551, %v2091
        %v2093 = vpop.f32.mrb[0].mxu0
        %v2094 = vpop.f32.mrb[0].mxu0
        %v2095 = vadd.f32 %v551, %v2094
        %v2096 = vpop.f32.mrb[0].mxu0
        %2097 = vmatprep.mubr.bf16.mxu0 0
        %2098 = vmatmul.mubr.bf16.gmra.mrb[0].mxu0 %v1152
        %v2099 = vpop.f32.mrb[0].mxu0
        %v2100 = vadd.f32 %v551, %v2099
        %v2101 = vpop.f32.mrb[0].mxu0
        %v2102 = vpop.f32.mrb[0].mxu0
        %v2103 = vadd.f32 %v551, %v2102
        %v2104 = vpop.f32.mrb[0].mxu0
        %2105 = vmatprep.mubr.bf16.mxu0 0
        %2106 = vmatmul.mubr.bf16.gmra.mrb[0].mxu0 %v1153
        %v2107 = vpop.f32.mrb[0].mxu0
        %v2108 = vadd.f32 %v551, %v2107
        %v2109 = vpop.f32.mrb[0].mxu0
        %v2110 = vpop.f32.mrb[0].mxu0
        %v2111 = vadd.f32 %v551, %v2110
        %v2112 = vpop.f32.mrb[0].mxu0
        %2113 = vmatprep.mubr.bf16.mxu0 0
        %2114 = vmatmul.mubr.bf16.gmra.mrb[0].mxu0 %v1154
        %v2115 = vpop.f32.mrb[0].mxu0
        %v2116 = vadd.f32 %v551, %v2115
        %v2117 = vpop.f32.mrb[0].mxu0
        %v2118 = vpop.f32.mrb[0].mxu0
        %v2119 = vadd.f32 %v551, %v2118
        %v2120 = vpop.f32.mrb[0].mxu0
        %2121 = vmatprep.mubr.bf16.mxu0 0
        %2122 = vmatmul.mubr.bf16.gmra.mrb[0].mxu0 %v1155
        %v2123 = vpop.f32.mrb[0].mxu0
        %v2124 = vadd.f32 %v551, %v2123
        %v2125 = vpop.f32.mrb[0].mxu0
        %v2126 = vpop.f32.mrb[0].mxu0
        %v2127 = vadd.f32 %v551, %v2126
        %v2128 = vpop.f32.mrb[0].mxu0
        %2129 = vmatprep.mubr.bf16.mxu0 0
        %2130 = vmatmul.mubr.bf16.gmra.mrb[0].mxu0 %v1156
        %v2131 = vpop.f32.mrb[0].mxu0
        %v2132 = vadd.f32 %v551, %v2131
        %v2133 = vpop.f32.mrb[0].mxu0
        %v2134 = vpop.f32.mrb[0].mxu0
        %v2135 = vadd.f32 %v551, %v2134
        %v2136 = vpop.f32.mrb[0].mxu0
        %2137 = vmatprep.mubr.bf16.mxu0 0
        %2138 = vmatmul.mubr.bf16.gmra.mrb[0].mxu0 %v1157
        %v2139 = vpop.f32.mrb[0].mxu0
        %v2140 = vadd.f32 %v551, %v2139
        %v2141 = vpop.f32.mrb[0].mxu0
        %v2142 = vpop.f32.mrb[0].mxu0
        %v2143 = vadd.f32 %v551, %v2142
        %v2144 = vpop.f32.mrb[0].mxu0
        %2145 = vmatprep.mubr.bf16.mxu0 0
        %2146 = vmatmul.mubr.bf16.gmra.mrb[0].mxu0 %v1158
        %v2147 = vpop.f32.mrb[0].mxu0
        %v2148 = vadd.f32 %v551, %v2147
        %v2149 = vpop.f32.mrb[0].mxu0
        %v2150 = vpop.f32.mrb[0].mxu0
        %v2151 = vadd.f32 %v551, %v2150
        %v2152 = vpop.f32.mrb[0].mxu0
        %2153 = vmatprep.mubr.bf16.mxu0 0
        %2154 = vmatmul.mubr.bf16.gmra.mrb[0].mxu0 %v1159
        %v2155 = vpop.f32.mrb[0].mxu0
        %v2156 = vadd.f32 %v551, %v2155
        %v2157 = vpop.f32.mrb[0].mxu0
        %v2158 = vpop.f32.mrb[0].mxu0
        %v2159 = vadd.f32 %v551, %v2158
        %v2160 = vpop.f32.mrb[0].mxu0
        %2161 = vmatprep.mubr.bf16.mxu0 0
        %2162 = vmatmul.mubr.bf16.gmra.mrb[0].mxu0 %v1160
        %v2163 = vpop.f32.mrb[0].mxu0
        %v2164 = vadd.f32 %v551, %v2163
        %v2165 = vpop.f32.mrb[0].mxu0
        %v2166 = vpop.f32.mrb[0].mxu0
        %v2167 = vadd.f32 %v551, %v2166
        %v2168 = vpop.f32.mrb[0].mxu0
        %2169 = vmatprep.mubr.bf16.mxu0 0
        %2170 = vmatmul.mubr.bf16.gmra.mrb[0].mxu0 %v1161
        %v2171 = vpop.f32.mrb[0].mxu0
        %v2172 = vadd.f32 %v551, %v2171
        %v2173 = vpop.f32.mrb[0].mxu0
        %v2174 = vpop.f32.mrb[0].mxu0
        %v2175 = vadd.f32 %v551, %v2174
        %v2176 = vpop.f32.mrb[0].mxu0
        %2177 = vmatprep.mubr.bf16.mxu0 0
        %2178 = vmatmul.mubr.bf16.gmra.mrb[0].mxu0 %v1162
        %v2179 = vpop.f32.mrb[0].mxu0
        %v2180 = vadd.f32 %v551, %v2179
        %v2181 = vpop.f32.mrb[0].mxu0
        %v2182 = vpop.f32.mrb[0].mxu0
        %v2183 = vadd.f32 %v551, %v2182
        %v2184 = vpop.f32.mrb[0].mxu0
        %2185 = vmatprep.mubr.bf16.mxu0 0
        %2186 = vmatmul.mubr.bf16.gmra.mrb[0].mxu0 %v1163
        %v2187 = vpop.f32.mrb[0].mxu0
        %v2188 = vadd.f32 %v551, %v2187
        %v2189 = vpop.f32.mrb[0].mxu0
        %v2190 = vpop.f32.mrb[0].mxu0
        %v2191 = vadd.f32 %v551, %v2190
        %v2192 = vpop.f32.mrb[0].mxu0
        %2193 = vmatprep.mubr.bf16.mxu0 0
        %2194 = vmatmul.mubr.bf16.gmra.mrb[0].mxu0 %v1164
        %v2195 = vpop.f32.mrb[0].mxu0
        %v2196 = vadd.f32 %v551, %v2195
        %v2197 = vpop.f32.mrb[0].mxu0
        %v2198 = vpop.f32.mrb[0].mxu0
        %v2199 = vadd.f32 %v551, %v2198
        %v2200 = vpop.f32.mrb[0].mxu0
        %2201 = vmatprep.mubr.bf16.mxu0 0
        %2202 = vmatmul.mubr.bf16.gmra.mrb[0].mxu0 %v1165
        %v2203 = vpop.f32.mrb[0].mxu0
        %v2204 = vadd.f32 %v551, %v2203
        %v2205 = vpop.f32.mrb[0].mxu0
        %v2206 = vpop.f32.mrb[0].mxu0
        %v2207 = vadd.f32 %v551, %v2206
        %v2208 = vpop.f32.mrb[0].mxu0
        %2209 = vmatprep.mubr.bf16.mxu0 0
        %2210 = vmatmul.mubr.bf16.gmra.mrb[0].mxu0 %v1166
        %v2211 = vpop.f32.mrb[0].mxu0
        %v2212 = vadd.f32 %v551, %v2211
        %v2213 = vpop.f32.mrb[0].mxu0
        %v2214 = vpop.f32.mrb[0].mxu0
        %v2215 = vadd.f32 %v551, %v2214
        %v2216 = vpop.f32.mrb[0].mxu0
        %2217 = vmatprep.mubr.bf16.mxu0 0
        %2218 = vmatmul.mubr.bf16.gmra.mrb[0].mxu0 %v1167
        %v2219 = vpop.f32.mrb[0].mxu0
        %v2220 = vadd.f32 %v551, %v2219
        %v2221 = vpop.f32.mrb[0].mxu0
        %v2222 = vpop.f32.mrb[0].mxu0
        %v2223 = vadd.f32 %v551, %v2222
        %v2224 = vpop.f32.mrb[0].mxu0
        %2225 = vmatprep.mubr.bf16.mxu0 0
        %2226 = vmatmul.mubr.bf16.gmra.mrb[0].mxu0 %v1168
        %v2227 = vpop.f32.mrb[0].mxu0
        %v2228 = vadd.f32 %v551, %v2227
        %v2229 = vpop.f32.mrb[0].mxu0
        %v2230 = vpop.f32.mrb[0].mxu0
        %v2231 = vadd.f32 %v551, %v2230
        %v2232 = vpop.f32.mrb[0].mxu0
        %2233 = vmatprep.mubr.bf16.mxu0 0
        %2234 = vmatmul.mubr.bf16.gmra.mrb[0].mxu0 %v1169
        %v2235 = vpop.f32.mrb[0].mxu0
        %v2236 = vadd.f32 %v551, %v2235
        %v2237 = vpop.f32.mrb[0].mxu0
        %v2238 = vpop.f32.mrb[0].mxu0
        %v2239 = vadd.f32 %v551, %v2238
        %v2240 = vpop.f32.mrb[0].mxu0
        %2241 = vmatprep.mubr.bf16.mxu0 0
        %2242 = vmatmul.mubr.bf16.gmra.mrb[0].mxu0 %v1170
        %v2243 = vpop.f32.mrb[0].mxu0
        %v2244 = vadd.f32 %v551, %v2243
        %v2245 = vpop.f32.mrb[0].mxu0
        %v2246 = vpop.f32.mrb[0].mxu0
        %v2247 = vadd.f32 %v551, %v2246
        %v2248 = vpop.f32.mrb[0].mxu0
        %2249 = vmatprep.mubr.bf16.mxu0 0
        %2250 = vmatmul.mubr.bf16.gmra.mrb[0].mxu0 %v1171
        %v2251 = vpop.f32.mrb[0].mxu0
        %v2252 = vadd.f32 %v551, %v2251
        %v2253 = vpop.f32.mrb[0].mxu0
        %v2254 = vpop.f32.mrb[0].mxu0
        %v2255 = vadd.f32 %v551, %v2254
        %v2256 = vpop.f32.mrb[0].mxu0
        %2257 = vmatprep.mubr.bf16.mxu0 0
        %2258 = vmatmul.mubr.bf16.gmra.mrb[0].mxu0 %v1172
        %v2259 = vpop.f32.mrb[0].mxu0
        %v2260 = vadd.f32 %v551, %v2259
        %v2261 = vpop.f32.mrb[0].mxu0
        %v2262 = vpop.f32.mrb[0].mxu0
        %v2263 = vadd.f32 %v551, %v2262
        %v2264 = vpop.f32.mrb[0].mxu0
        %2265 = vmatprep.mubr.bf16.mxu0 0
        %2266 = vmatmul.mubr.bf16.gmra.mrb[0].mxu0 %v1173
        %v2267 = vpop.f32.mrb[0].mxu0
        %v2268 = vadd.f32 %v551, %v2267
        %v2269 = vpop.f32.mrb[0].mxu0
        %v2270 = vpop.f32.mrb[0].mxu0
        %v2271 = vadd.f32 %v551, %v2270
        %v2272 = vpop.f32.mrb[0].mxu0
        %2273 = vmatprep.mubr.bf16.mxu0 0
        %2274 = vmatmul.mubr.bf16.gmra.mrb[0].mxu0 %v1174
        %v2275 = vpop.f32.mrb[0].mxu0
        %v2276 = vadd.f32 %v551, %v2275
        %v2277 = vpop.f32.mrb[0].mxu0
        %v2278 = vpop.f32.mrb[0].mxu0
        %v2279 = vadd.f32 %v551, %v2278
        %v2280 = vpop.f32.mrb[0].mxu0
        %2281 = vmatprep.mubr.bf16.mxu0 0
        %2282 = vmatmul.mubr.bf16.gmra.mrb[0].mxu0 %v1175
        %v2283 = vpop.f32.mrb[0].mxu0
        %v2284 = vadd.f32 %v551, %v2283
        %v2285 = vpop.f32.mrb[0].mxu0
        %v2286 = vpop.f32.mrb[0].mxu0
        %v2287 = vadd.f32 %v551, %v2286
        %v2288 = vpop.f32.mrb[0].mxu0
        %2289 = vmatprep.mubr.bf16.mxu0 0
        %2290 = vmatmul.mubr.bf16.gmra.mrb[0].mxu0 %v1176
        %v2291 = vpop.f32.mrb[0].mxu0
        %v2292 = vadd.f32 %v551, %v2291
        %v2293 = vpop.f32.mrb[0].mxu0
        %v2294 = vpop.f32.mrb[0].mxu0
        %v2295 = vadd.f32 %v551, %v2294
        %v2296 = vpop.f32.mrb[0].mxu0
        %2297 = vmatprep.mubr.bf16.mxu0 0
        %2298 = vmatmul.mubr.bf16.gmra.mrb[0].mxu0 %v1177
        %v2299 = vpop.f32.mrb[0].mxu0
        %v2300 = vadd.f32 %v551, %v2299
        %v2301 = vpop.f32.mrb[0].mxu0
        %v2302 = vpop.f32.mrb[0].mxu0
        %v2303 = vadd.f32 %v551, %v2302
        %v2304 = vpop.f32.mrb[0].mxu0
        %2305 = vmatprep.mubr.bf16.mxu0 0
        %2306 = vmatmul.mubr.bf16.gmra.mrb[0].mxu0 %v1178
        %v2307 = vpop.f32.mrb[0].mxu0
        %v2308 = vadd.f32 %v551, %v2307
        %v2309 = vpop.f32.mrb[0].mxu0
        %v2310 = vpop.f32.mrb[0].mxu0
        %v2311 = vadd.f32 %v551, %v2310
        %v2312 = vpop.f32.mrb[0].mxu0
        %2313 = vmatprep.mubr.bf16.mxu0 0
        %2314 = vmatmul.mubr.bf16.gmra.mrb[0].mxu0 %v1179
        %v2315 = vpop.f32.mrb[0].mxu0
        %v2316 = vadd.f32 %v551, %v2315
        %v2317 = vpop.f32.mrb[0].mxu0
        %v2318 = vpop.f32.mrb[0].mxu0
        %v2319 = vadd.f32 %v551, %v2318
        %v2320 = vpop.f32.mrb[0].mxu0
        %2321 = vmatprep.mubr.bf16.mxu0 0
        %2322 = vmatmul.mubr.bf16.gmra.mrb[0].mxu0 %v1180
        %v2323 = vpop.f32.mrb[0].mxu0
        %v2324 = vadd.f32 %v551, %v2323
        %v2325 = vpop.f32.mrb[0].mxu0
        %v2326 = vpop.f32.mrb[0].mxu0
        %v2327 = vadd.f32 %v551, %v2326
        %v2328 = vpop.f32.mrb[0].mxu0
        %2329 = vmatprep.mubr.bf16.mxu0 0
        %2330 = vmatmul.mubr.bf16.gmra.mrb[0].mxu0 %v1181
        %v2331 = vpop.f32.mrb[0].mxu0
        %v2332 = vadd.f32 %v551, %v2331
        %v2333 = vpop.f32.mrb[0].mxu0
        %v2334 = vpop.f32.mrb[0].mxu0
        %v2335 = vadd.f32 %v551, %v2334
        %v2336 = vpop.f32.mrb[0].mxu0
        %2337 = vmatprep.mubr.bf16.mxu0 0
        %2338 = vmatmul.mubr.bf16.gmra.mrb[0].mxu0 %v1182
        %v2339 = vpop.f32.mrb[0].mxu0
        %v2340 = vadd.f32 %v551, %v2339
        %v2341 = vpop.f32.mrb[0].mxu0
        %v2342 = vpop.f32.mrb[0].mxu0
        %v2343 = vadd.f32 %v551, %v2342
        %v2344 = vpop.f32.mrb[0].mxu0
        %2345 = vmatprep.mubr.bf16.mxu0 0
        %2346 = vmatmul.mubr.bf16.gmra.mrb[0].mxu0 %v1183
        %v2347 = vpop.f32.mrb[0].mxu0
        %v2348 = vadd.f32 %v551, %v2347
        %v2349 = vpop.f32.mrb[0].mxu0
        %v2350 = vpop.f32.mrb[0].mxu0
        %v2351 = vadd.f32 %v551, %v2350
        %v2352 = vpop.f32.mrb[0].mxu0
        %2353 = vmatprep.mubr.bf16.mxu0 0
        %2354 = vmatmul.mubr.bf16.gmra.mrb[0].mxu0 %v1184
        %v2355 = vpop.f32.mrb[0].mxu0
        %v2356 = vadd.f32 %v551, %v2355
        %v2357 = vpop.f32.mrb[0].mxu0
        %v2358 = vpop.f32.mrb[0].mxu0
        %v2359 = vadd.f32 %v551, %v2358
        %v2360 = vpop.f32.mrb[0].mxu0
        %2361 = vmatprep.mubr.bf16.mxu0 0
        %2362 = vmatmul.mubr.bf16.gmra.mrb[0].mxu0 %v1185
        %v2363 = vpop.f32.mrb[0].mxu0
        %v2364 = vadd.f32 %v551, %v2363
        %v2365 = vpop.f32.mrb[0].mxu0
        %v2366 = vpop.f32.mrb[0].mxu0
        %v2367 = vadd.f32 %v551, %v2366
        %v2368 = vpop.f32.mrb[0].mxu0
        %2369 = vmatprep.mubr.bf16.mxu0 0
        %2370 = vmatmul.mubr.bf16.gmra.mrb[0].mxu0 %v1186
        %v2371 = vpop.f32.mrb[0].mxu0
        %v2372 = vadd.f32 %v551, %v2371
        %v2373 = vpop.f32.mrb[0].mxu0
        %v2374 = vpop.f32.mrb[0].mxu0
        %v2375 = vadd.f32 %v551, %v2374
        %v2376 = vpop.f32.mrb[0].mxu0
        %2377 = vmatprep.mubr.bf16.mxu0 0
        %2378 = vmatmul.mubr.bf16.gmra.mrb[0].mxu0 %v1187
        %v2379 = vpop.f32.mrb[0].mxu0
        %v2380 = vadd.f32 %v551, %v2379
        %v2381 = vpop.f32.mrb[0].mxu0
        %v2382 = vpop.f32.mrb[0].mxu0
        %v2383 = vadd.f32 %v551, %v2382
        %v2384 = vpop.f32.mrb[0].mxu0
        %2385 = vmatprep.mubr.bf16.mxu0 0
        %2386 = vmatmul.mubr.bf16.gmra.mrb[0].mxu0 %v1188
        %v2387 = vpop.f32.mrb[0].mxu0
        %v2388 = vadd.f32 %v551, %v2387
        %v2389 = vpop.f32.mrb[0].mxu0
        %v2390 = vpop.f32.mrb[0].mxu0
        %v2391 = vadd.f32 %v551, %v2390
        %v2392 = vpop.f32.mrb[0].mxu0
        %2393 = vmatprep.mubr.bf16.mxu0 0
        %2394 = vmatmul.mubr.bf16.gmra.mrb[0].mxu0 %v1189
        %v2395 = vpop.f32.mrb[0].mxu0
        %v2396 = vadd.f32 %v551, %v2395
        %v2397 = vpop.f32.mrb[0].mxu0
        %v2398 = vpop.f32.mrb[0].mxu0
        %v2399 = vadd.f32 %v551, %v2398
        %v2400 = vpop.f32.mrb[0].mxu0
        %2401 = vmatprep.mubr.bf16.mxu0 0
        %2402 = vmatmul.mubr.bf16.gmra.mrb[0].mxu0 %v1190
        %v2403 = vpop.f32.mrb[0].mxu0
        %v2404 = vadd.f32 %v551, %v2403
        %v2405 = vpop.f32.mrb[0].mxu0
        %v2406 = vpop.f32.mrb[0].mxu0
        %v2407 = vadd.f32 %v551, %v2406
        %v2408 = vpop.f32.mrb[0].mxu0
        %2409 = vmatprep.mubr.bf16.mxu0 0
        %2410 = vmatmul.mubr.bf16.gmra.mrb[0].mxu0 %v1191
        %v2411 = vpop.f32.mrb[0].mxu0
        %v2412 = vadd.f32 %v551, %v2411
        %v2413 = vpop.f32.mrb[0].mxu0
        %v2414 = vpop.f32.mrb[0].mxu0
        %v2415 = vadd.f32 %v551, %v2414
        %v2416 = vpop.f32.mrb[0].mxu0
        %2417 = vmatprep.mubr.bf16.mxu0 0
        %2418 = vmatmul.mubr.bf16.gmra.mrb[0].mxu0 %v1192
        %v2419 = vpop.f32.mrb[0].mxu0
        %v2420 = vadd.f32 %v551, %v2419
        %v2421 = vpop.f32.mrb[0].mxu0
        %v2422 = vpop.f32.mrb[0].mxu0
        %v2423 = vadd.f32 %v551, %v2422
        %v2424 = vpop.f32.mrb[0].mxu0
        %2425 = vdwg.mxu0
        %v2426 = vmax.f32 %v1404, 0.0
        %v2427 = vmax.f32 %v1407, 0.0
        %v2428 = vmax.f32 %v1412, 0.0
        %v2429 = vmax.f32 %v1415, 0.0
        %v2430 = vmax.f32 %v1420, 0.0
        %v2431 = vmax.f32 %v1423, 0.0
        %v2432 = vmax.f32 %v1428, 0.0
        %v2433 = vmax.f32 %v1431, 0.0
        %v2434 = vmax.f32 %v1436, 0.0
        %v2435 = vmax.f32 %v1439, 0.0
        %v2436 = vmax.f32 %v1444, 0.0
        %v2437 = vmax.f32 %v1447, 0.0
        %v2438 = vmax.f32 %v1452, 0.0
        %v2439 = vmax.f32 %v1455, 0.0
        %v2440 = vmax.f32 %v1460, 0.0
        %v2441 = vmax.f32 %v1463, 0.0
        %v2442 = vmax.f32 %v1468, 0.0
        %v2443 = vmax.f32 %v1471, 0.0
        %v2444 = vmax.f32 %v1476, 0.0
        %v2445 = vmax.f32 %v1479, 0.0
        %v2446 = vmax.f32 %v1484, 0.0
        %v2447 = vmax.f32 %v1487, 0.0
        %v2448 = vmax.f32 %v1492, 0.0
        %v2449 = vmax.f32 %v1495, 0.0
        %v2450 = vmax.f32 %v1500, 0.0
        %v2451 = vmax.f32 %v1503, 0.0
        %v2452 = vmax.f32 %v1508, 0.0
        %v2453 = vmax.f32 %v1511, 0.0
        %v2454 = vmax.f32 %v1516, 0.0
        %v2455 = vmax.f32 %v1519, 0.0
        %v2456 = vmax.f32 %v1524, 0.0
        %v2457 = vmax.f32 %v1527, 0.0
        %v2458 = vmax.f32 %v1532, 0.0
        %v2459 = vmax.f32 %v1535, 0.0
        %v2460 = vmax.f32 %v1540, 0.0
        %v2461 = vmax.f32 %v1543, 0.0
        %v2462 = vmax.f32 %v1548, 0.0
        %v2463 = vmax.f32 %v1551, 0.0
        %v2464 = vmax.f32 %v1556, 0.0
        %v2465 = vmax.f32 %v1559, 0.0
        %v2466 = vmax.f32 %v1564, 0.0
        %v2467 = vmax.f32 %v1567, 0.0
        %v2468 = vmax.f32 %v1572, 0.0
        %v2469 = vmax.f32 %v1575, 0.0
        %v2470 = vmax.f32 %v1580, 0.0
        %v2471 = vmax.f32 %v1583, 0.0
        %v2472 = vmax.f32 %v1588, 0.0
        %v2473 = vmax.f32 %v1591, 0.0
        %v2474 = vmax.f32 %v1596, 0.0
        %v2475 = vmax.f32 %v1599, 0.0
        %v2476 = vmax.f32 %v1604, 0.0
        %v2477 = vmax.f32 %v1607, 0.0
        %v2478 = vmax.f32 %v1612, 0.0
        %v2479 = vmax.f32 %v1615, 0.0
        %v2480 = vmax.f32 %v1620, 0.0
        %v2481 = vmax.f32 %v1623, 0.0
        %v2482 = vmax.f32 %v1628, 0.0
        %v2483 = vmax.f32 %v1631, 0.0
        %v2484 = vmax.f32 %v1636, 0.0
        %v2485 = vmax.f32 %v1639, 0.0
        %v2486 = vmax.f32 %v1644, 0.0
        %v2487 = vmax.f32 %v1647, 0.0
        %v2488 = vmax.f32 %v1652, 0.0
        %v2489 = vmax.f32 %v1655, 0.0
        %v2490 = vmax.f32 %v1660, 0.0
        %v2491 = vmax.f32 %v1663, 0.0
        %v2492 = vmax.f32 %v1668, 0.0
        %v2493 = vmax.f32 %v1671, 0.0
        %v2494 = vmax.f32 %v1676, 0.0
        %v2495 = vmax.f32 %v1679, 0.0
        %v2496 = vmax.f32 %v1684, 0.0
        %v2497 = vmax.f32 %v1687, 0.0
        %v2498 = vmax.f32 %v1692, 0.0
        %v2499 = vmax.f32 %v1695, 0.0
        %v2500 = vmax.f32 %v1700, 0.0
        %v2501 = vmax.f32 %v1703, 0.0
        %v2502 = vmax.f32 %v1708, 0.0
        %v2503 = vmax.f32 %v1711, 0.0
        %v2504 = vmax.f32 %v1716, 0.0
        %v2505 = vmax.f32 %v1719, 0.0
        %v2506 = vmax.f32 %v1724, 0.0
        %v2507 = vmax.f32 %v1727, 0.0
        %v2508 = vmax.f32 %v1732, 0.0
        %v2509 = vmax.f32 %v1735, 0.0
        %v2510 = vmax.f32 %v1740, 0.0
        %v2511 = vmax.f32 %v1743, 0.0
        %v2512 = vmax.f32 %v1748, 0.0
        %v2513 = vmax.f32 %v1751, 0.0
        %v2514 = vmax.f32 %v1756, 0.0
        %v2515 = vmax.f32 %v1759, 0.0
        %v2516 = vmax.f32 %v1764, 0.0
        %v2517 = vmax.f32 %v1767, 0.0
        %v2518 = vmax.f32 %v1772, 0.0
        %v2519 = vmax.f32 %v1775, 0.0
        %v2520 = vmax.f32 %v1780, 0.0
        %v2521 = vmax.f32 %v1783, 0.0
        %v2522 = vmax.f32 %v1788, 0.0
        %v2523 = vmax.f32 %v1791, 0.0
        %v2524 = vmax.f32 %v1796, 0.0
        %v2525 = vmax.f32 %v1799, 0.0
        %v2526 = vmax.f32 %v1804, 0.0
        %v2527 = vmax.f32 %v1807, 0.0
        %v2528 = vmax.f32 %v1812, 0.0
        %v2529 = vmax.f32 %v1815, 0.0
        %v2530 = vmax.f32 %v1820, 0.0
        %v2531 = vmax.f32 %v1823, 0.0
        %v2532 = vmax.f32 %v1828, 0.0
        %v2533 = vmax.f32 %v1831, 0.0
        %v2534 = vmax.f32 %v1836, 0.0
        %v2535 = vmax.f32 %v1839, 0.0
        %v2536 = vmax.f32 %v1844, 0.0
        %v2537 = vmax.f32 %v1847, 0.0
        %v2538 = vmax.f32 %v1852, 0.0
        %v2539 = vmax.f32 %v1855, 0.0
        %v2540 = vmax.f32 %v1860, 0.0
        %v2541 = vmax.f32 %v1863, 0.0
        %v2542 = vmax.f32 %v1868, 0.0
        %v2543 = vmax.f32 %v1871, 0.0
        %v2544 = vmax.f32 %v1876, 0.0
        %v2545 = vmax.f32 %v1879, 0.0
        %v2546 = vmax.f32 %v1884, 0.0
        %v2547 = vmax.f32 %v1887, 0.0
        %v2548 = vmax.f32 %v1892, 0.0
        %v2549 = vmax.f32 %v1895, 0.0
        %v2550 = vmax.f32 %v1900, 0.0
        %v2551 = vmax.f32 %v1903, 0.0
        %v2552 = vmax.f32 %v1908, 0.0
        %v2553 = vmax.f32 %v1911, 0.0
        %v2554 = vmax.f32 %v1916, 0.0
        %v2555 = vmax.f32 %v1919, 0.0
        %v2556 = vmax.f32 %v1924, 0.0
        %v2557 = vmax.f32 %v1927, 0.0
        %v2558 = vmax.f32 %v1932, 0.0
        %v2559 = vmax.f32 %v1935, 0.0
        %v2560 = vmax.f32 %v1940, 0.0
        %v2561 = vmax.f32 %v1943, 0.0
        %v2562 = vmax.f32 %v1948, 0.0
        %v2563 = vmax.f32 %v1951, 0.0
        %v2564 = vmax.f32 %v1956, 0.0
        %v2565 = vmax.f32 %v1959, 0.0
        %v2566 = vmax.f32 %v1964, 0.0
        %v2567 = vmax.f32 %v1967, 0.0
        %v2568 = vmax.f32 %v1972, 0.0
        %v2569 = vmax.f32 %v1975, 0.0
        %v2570 = vmax.f32 %v1980, 0.0
        %v2571 = vmax.f32 %v1983, 0.0
        %v2572 = vmax.f32 %v1988, 0.0
        %v2573 = vmax.f32 %v1991, 0.0
        %v2574 = vmax.f32 %v1996, 0.0
        %v2575 = vmax.f32 %v1999, 0.0
        %v2576 = vmax.f32 %v2004, 0.0
        %v2577 = vmax.f32 %v2007, 0.0
        %v2578 = vmax.f32 %v2012, 0.0
        %v2579 = vmax.f32 %v2015, 0.0
        %v2580 = vmax.f32 %v2020, 0.0
        %v2581 = vmax.f32 %v2023, 0.0
        %v2582 = vmax.f32 %v2028, 0.0
        %v2583 = vmax.f32 %v2031, 0.0
        %v2584 = vmax.f32 %v2036, 0.0
        %v2585 = vmax.f32 %v2039, 0.0
        %v2586 = vmax.f32 %v2044, 0.0
        %v2587 = vmax.f32 %v2047, 0.0
        %v2588 = vmax.f32 %v2052, 0.0
        %v2589 = vmax.f32 %v2055, 0.0
        %v2590 = vmax.f32 %v2060, 0.0
        %v2591 = vmax.f32 %v2063, 0.0
        %v2592 = vmax.f32 %v2068, 0.0
        %v2593 = vmax.f32 %v2071, 0.0
        %v2594 = vmax.f32 %v2076, 0.0
        %v2595 = vmax.f32 %v2079, 0.0
        %v2596 = vmax.f32 %v2084, 0.0
        %v2597 = vmax.f32 %v2087, 0.0
        %v2598 = vmax.f32 %v2092, 0.0
        %v2599 = vmax.f32 %v2095, 0.0
        %v2600 = vmax.f32 %v2100, 0.0
        %v2601 = vmax.f32 %v2103, 0.0
        %v2602 = vmax.f32 %v2108, 0.0
        %v2603 = vmax.f32 %v2111, 0.0
        %v2604 = vmax.f32 %v2116, 0.0
        %v2605 = vmax.f32 %v2119, 0.0
        %v2606 = vmax.f32 %v2124, 0.0
        %v2607 = vmax.f32 %v2127, 0.0
        %v2608 = vmax.f32 %v2132, 0.0
        %v2609 = vmax.f32 %v2135, 0.0
        %v2610 = vmax.f32 %v2140, 0.0
        %v2611 = vmax.f32 %v2143, 0.0
        %v2612 = vmax.f32 %v2148, 0.0
        %v2613 = vmax.f32 %v2151, 0.0
        %v2614 = vmax.f32 %v2156, 0.0
        %v2615 = vmax.f32 %v2159, 0.0
        %v2616 = vmax.f32 %v2164, 0.0
        %v2617 = vmax.f32 %v2167, 0.0
        %v2618 = vmax.f32 %v2172, 0.0
        %v2619 = vmax.f32 %v2175, 0.0
        %v2620 = vmax.f32 %v2180, 0.0
        %v2621 = vmax.f32 %v2183, 0.0
        %v2622 = vmax.f32 %v2188, 0.0
        %v2623 = vmax.f32 %v2191, 0.0
        %v2624 = vmax.f32 %v2196, 0.0
        %v2625 = vmax.f32 %v2199, 0.0
        %v2626 = vmax.f32 %v2204, 0.0
        %v2627 = vmax.f32 %v2207, 0.0
        %v2628 = vmax.f32 %v2212, 0.0
        %v2629 = vmax.f32 %v2215, 0.0
        %v2630 = vmax.f32 %v2220, 0.0
        %v2631 = vmax.f32 %v2223, 0.0
        %v2632 = vmax.f32 %v2228, 0.0
        %v2633 = vmax.f32 %v2231, 0.0
        %v2634 = vmax.f32 %v2236, 0.0
        %v2635 = vmax.f32 %v2239, 0.0
        %v2636 = vmax.f32 %v2244, 0.0
        %v2637 = vmax.f32 %v2247, 0.0
        %v2638 = vmax.f32 %v2252, 0.0
        %v2639 = vmax.f32 %v2255, 0.0
        %v2640 = vmax.f32 %v2260, 0.0
        %v2641 = vmax.f32 %v2263, 0.0
        %v2642 = vmax.f32 %v2268, 0.0
        %v2643 = vmax.f32 %v2271, 0.0
        %v2644 = vmax.f32 %v2276, 0.0
        %v2645 = vmax.f32 %v2279, 0.0
        %v2646 = vmax.f32 %v2284, 0.0
        %v2647 = vmax.f32 %v2287, 0.0
        %v2648 = vmax.f32 %v2292, 0.0
        %v2649 = vmax.f32 %v2295, 0.0
        %v2650 = vmax.f32 %v2300, 0.0
        %v2651 = vmax.f32 %v2303, 0.0
        %v2652 = vmax.f32 %v2308, 0.0
        %v2653 = vmax.f32 %v2311, 0.0
        %v2654 = vmax.f32 %v2316, 0.0
        %v2655 = vmax.f32 %v2319, 0.0
        %v2656 = vmax.f32 %v2324, 0.0
        %v2657 = vmax.f32 %v2327, 0.0
        %v2658 = vmax.f32 %v2332, 0.0
        %v2659 = vmax.f32 %v2335, 0.0
        %v2660 = vmax.f32 %v2340, 0.0
        %v2661 = vmax.f32 %v2343, 0.0
        %v2662 = vmax.f32 %v2348, 0.0
        %v2663 = vmax.f32 %v2351, 0.0
        %v2664 = vmax.f32 %v2356, 0.0
        %v2665 = vmax.f32 %v2359, 0.0
        %v2666 = vmax.f32 %v2364, 0.0
        %v2667 = vmax.f32 %v2367, 0.0
        %v2668 = vmax.f32 %v2372, 0.0
        %v2669 = vmax.f32 %v2375, 0.0
        %v2670 = vmax.f32 %v2380, 0.0
        %v2671 = vmax.f32 %v2383, 0.0
        %v2672 = vmax.f32 %v2388, 0.0
        %v2673 = vmax.f32 %v2391, 0.0
        %v2674 = vmax.f32 %v2396, 0.0
        %v2675 = vmax.f32 %v2399, 0.0
        %v2676 = vmax.f32 %v2404, 0.0
        %v2677 = vmax.f32 %v2407, 0.0
        %v2678 = vmax.f32 %v2412, 0.0
        %v2679 = vmax.f32 %v2415, 0.0
        %v2680 = vmax.f32 %v2420, 0.0
        %v2681 = vmax.f32 %v2423, 0.0
        %v2682 = vadd.f32 %v2426, %v2427
        %v2683 = vadd.f32 %v2682, %v2428
        %v2684 = vadd.f32 %v2683, %v2429
        %v2685 = vadd.f32 %v2684, %v2430
        %v2686 = vadd.f32 %v2685, %v2431
        %v2687 = vadd.f32 %v2686, %v2432
        %v2688 = vadd.f32 %v2687, %v2433
        %v2689 = vadd.f32 %v2688, %v2434
        %v2690 = vadd.f32 %v2689, %v2435
        %v2691 = vadd.f32 %v2690, %v2436
        %v2692 = vadd.f32 %v2691, %v2437
        %v2693 = vadd.f32 %v2692, %v2438
        %v2694 = vadd.f32 %v2693, %v2439
        %v2695 = vadd.f32 %v2694, %v2440
        %v2696 = vadd.f32 %v2695, %v2441
        %v2697 = vadd.f32 %v2696, %v2442
        %v2698 = vadd.f32 %v2697, %v2443
        %v2699 = vadd.f32 %v2698, %v2444
        %v2700 = vadd.f32 %v2699, %v2445
        %v2701 = vadd.f32 %v2700, %v2446
        %v2702 = vadd.f32 %v2701, %v2447
        %v2703 = vadd.f32 %v2702, %v2448
        %v2704 = vadd.f32 %v2703, %v2449
        %v2705 = vadd.f32 %v2704, %v2450
        %v2706 = vadd.f32 %v2705, %v2451
        %v2707 = vadd.f32 %v2706, %v2452
        %v2708 = vadd.f32 %v2707, %v2453
        %v2709 = vadd.f32 %v2708, %v2454
        %v2710 = vadd.f32 %v2709, %v2455
        %v2711 = vadd.f32 %v2710, %v2456
        %v2712 = vadd.f32 %v2711, %v2457
        %v2713 = vrot.slane %v2712, 4
        %v2714 = vadd.f32 %v2712, %v2713
        %v2715 = vrot.slane %v2714, 2
        %v2716 = vadd.f32 %v2714, %v2715
        %v2717 = vrot.slane %v2716, 1
        %v2718 = vadd.f32 %v2716, %v2717
        %v2719 = vadd.f32 %v2458, %v2459
        %v2720 = vadd.f32 %v2719, %v2460
        %v2721 = vadd.f32 %v2720, %v2461
        %v2722 = vadd.f32 %v2721, %v2462
        %v2723 = vadd.f32 %v2722, %v2463
        %v2724 = vadd.f32 %v2723, %v2464
        %v2725 = vadd.f32 %v2724, %v2465
        %v2726 = vadd.f32 %v2725, %v2466
        %v2727 = vadd.f32 %v2726, %v2467
        %v2728 = vadd.f32 %v2727, %v2468
        %v2729 = vadd.f32 %v2728, %v2469
        %v2730 = vadd.f32 %v2729, %v2470
        %v2731 = vadd.f32 %v2730, %v2471
        %v2732 = vadd.f32 %v2731, %v2472
        %v2733 = vadd.f32 %v2732, %v2473
        %v2734 = vadd.f32 %v2733, %v2474
        %v2735 = vadd.f32 %v2734, %v2475
        %v2736 = vadd.f32 %v2735, %v2476
        %v2737 = vadd.f32 %v2736, %v2477
        %v2738 = vadd.f32 %v2737, %v2478
        %v2739 = vadd.f32 %v2738, %v2479
        %v2740 = vadd.f32 %v2739, %v2480
        %v2741 = vadd.f32 %v2740, %v2481
        %v2742 = vadd.f32 %v2741, %v2482
        %v2743 = vadd.f32 %v2742, %v2483
        %v2744 = vadd.f32 %v2743, %v2484
        %v2745 = vadd.f32 %v2744, %v2485
        %v2746 = vadd.f32 %v2745, %v2486
        %v2747 = vadd.f32 %v2746, %v2487
        %v2748 = vadd.f32 %v2747, %v2488
        %v2749 = vadd.f32 %v2748, %v2489
        %v2750 = vrot.slane %v2749, 4
        %v2751 = vadd.f32 %v2749, %v2750
        %v2752 = vrot.slane %v2751, 2
        %v2753 = vadd.f32 %v2751, %v2752
        %v2754 = vrot.slane %v2753, 1
        %v2755 = vadd.f32 %v2753, %v2754
        %v2756 = vadd.f32 %v2490, %v2491
        %v2757 = vadd.f32 %v2756, %v2492
        %v2758 = vadd.f32 %v2757, %v2493
        %v2759 = vadd.f32 %v2758, %v2494
        %v2760 = vadd.f32 %v2759, %v2495
        %v2761 = vadd.f32 %v2760, %v2496
        %v2762 = vadd.f32 %v2761, %v2497
        %v2763 = vadd.f32 %v2762, %v2498
        %v2764 = vadd.f32 %v2763, %v2499
        %v2765 = vadd.f32 %v2764, %v2500
        %v2766 = vadd.f32 %v2765, %v2501
        %v2767 = vadd.f32 %v2766, %v2502
        %v2768 = vadd.f32 %v2767, %v2503
        %v2769 = vadd.f32 %v2768, %v2504
        %v2770 = vadd.f32 %v2769, %v2505
        %v2771 = vadd.f32 %v2770, %v2506
        %v2772 = vadd.f32 %v2771, %v2507
        %v2773 = vadd.f32 %v2772, %v2508
        %v2774 = vadd.f32 %v2773, %v2509
        %v2775 = vadd.f32 %v2774, %v2510
        %v2776 = vadd.f32 %v2775, %v2511
        %v2777 = vadd.f32 %v2776, %v2512
        %v2778 = vadd.f32 %v2777, %v2513
        %v2779 = vadd.f32 %v2778, %v2514
        %v2780 = vadd.f32 %v2779, %v2515
        %v2781 = vadd.f32 %v2780, %v2516
        %v2782 = vadd.f32 %v2781, %v2517
        %v2783 = vadd.f32 %v2782, %v2518
        %v2784 = vadd.f32 %v2783, %v2519
        %v2785 = vadd.f32 %v2784, %v2520
        %v2786 = vadd.f32 %v2785, %v2521
        %v2787 = vrot.slane %v2786, 4
        %v2788 = vadd.f32 %v2786, %v2787
        %v2789 = vrot.slane %v2788, 2
        %v2790 = vadd.f32 %v2788, %v2789
        %v2791 = vrot.slane %v2790, 1
        %v2792 = vadd.f32 %v2790, %v2791
        %v2793 = vadd.f32 %v2522, %v2523
        %v2794 = vadd.f32 %v2793, %v2524
        %v2795 = vadd.f32 %v2794, %v2525
        %v2796 = vadd.f32 %v2795, %v2526
        %v2797 = vadd.f32 %v2796, %v2527
        %v2798 = vadd.f32 %v2797, %v2528
        %v2799 = vadd.f32 %v2798, %v2529
        %v2800 = vadd.f32 %v2799, %v2530
        %v2801 = vadd.f32 %v2800, %v2531
        %v2802 = vadd.f32 %v2801, %v2532
        %v2803 = vadd.f32 %v2802, %v2533
        %v2804 = vadd.f32 %v2803, %v2534
        %v2805 = vadd.f32 %v2804, %v2535
        %v2806 = vadd.f32 %v2805, %v2536
        %v2807 = vadd.f32 %v2806, %v2537
        %v2808 = vadd.f32 %v2807, %v2538
        %v2809 = vadd.f32 %v2808, %v2539
        %v2810 = vadd.f32 %v2809, %v2540
        %v2811 = vadd.f32 %v2810, %v2541
        %v2812 = vadd.f32 %v2811, %v2542
        %v2813 = vadd.f32 %v2812, %v2543
        %v2814 = vadd.f32 %v2813, %v2544
        %v2815 = vadd.f32 %v2814, %v2545
        %v2816 = vadd.f32 %v2815, %v2546
        %v2817 = vadd.f32 %v2816, %v2547
        %v2818 = vadd.f32 %v2817, %v2548
        %v2819 = vadd.f32 %v2818, %v2549
        %v2820 = vadd.f32 %v2819, %v2550
        %v2821 = vadd.f32 %v2820, %v2551
        %v2822 = vadd.f32 %v2821, %v2552
        %v2823 = vadd.f32 %v2822, %v2553
        %v2824 = vrot.slane %v2823, 4
        %v2825 = vadd.f32 %v2823, %v2824
        %v2826 = vrot.slane %v2825, 2
        %v2827 = vadd.f32 %v2825, %v2826
        %v2828 = vrot.slane %v2827, 1
        %v2829 = vadd.f32 %v2827, %v2828
        %v2830 = vadd.f32 %v2554, %v2555
        %v2831 = vadd.f32 %v2830, %v2556
        %v2832 = vadd.f32 %v2831, %v2557
        %v2833 = vadd.f32 %v2832, %v2558
        %v2834 = vadd.f32 %v2833, %v2559
        %v2835 = vadd.f32 %v2834, %v2560
        %v2836 = vadd.f32 %v2835, %v2561
        %v2837 = vadd.f32 %v2836, %v2562
        %v2838 = vadd.f32 %v2837, %v2563
        %v2839 = vadd.f32 %v2838, %v2564
        %v2840 = vadd.f32 %v2839, %v2565
        %v2841 = vadd.f32 %v2840, %v2566
        %v2842 = vadd.f32 %v2841, %v2567
        %v2843 = vadd.f32 %v2842, %v2568
        %v2844 = vadd.f32 %v2843, %v2569
        %v2845 = vadd.f32 %v2844, %v2570
        %v2846 = vadd.f32 %v2845, %v2571
        %v2847 = vadd.f32 %v2846, %v2572
        %v2848 = vadd.f32 %v2847, %v2573
        %v2849 = vadd.f32 %v2848, %v2574
        %v2850 = vadd.f32 %v2849, %v2575
        %v2851 = vadd.f32 %v2850, %v2576
        %v2852 = vadd.f32 %v2851, %v2577
        %v2853 = vadd.f32 %v2852, %v2578
        %v2854 = vadd.f32 %v2853, %v2579
        %v2855 = vadd.f32 %v2854, %v2580
        %v2856 = vadd.f32 %v2855, %v2581
        %v2857 = vadd.f32 %v2856, %v2582
        %v2858 = vadd.f32 %v2857, %v2583
        %v2859 = vadd.f32 %v2858, %v2584
        %v2860 = vadd.f32 %v2859, %v2585
        %v2861 = vrot.slane %v2860, 4
        %v2862 = vadd.f32 %v2860, %v2861
        %v2863 = vrot.slane %v2862, 2
        %v2864 = vadd.f32 %v2862, %v2863
        %v2865 = vrot.slane %v2864, 1
        %v2866 = vadd.f32 %v2864, %v2865
        %v2867 = vadd.f32 %v2586, %v2587
        %v2868 = vadd.f32 %v2867, %v2588
        %v2869 = vadd.f32 %v2868, %v2589
        %v2870 = vadd.f32 %v2869, %v2590
        %v2871 = vadd.f32 %v2870, %v2591
        %v2872 = vadd.f32 %v2871, %v2592
        %v2873 = vadd.f32 %v2872, %v2593
        %v2874 = vadd.f32 %v2873, %v2594
        %v2875 = vadd.f32 %v2874, %v2595
        %v2876 = vadd.f32 %v2875, %v2596
        %v2877 = vadd.f32 %v2876, %v2597
        %v2878 = vadd.f32 %v2877, %v2598
        %v2879 = vadd.f32 %v2878, %v2599
        %v2880 = vadd.f32 %v2879, %v2600
        %v2881 = vadd.f32 %v2880, %v2601
        %v2882 = vadd.f32 %v2881, %v2602
        %v2883 = vadd.f32 %v2882, %v2603
        %v2884 = vadd.f32 %v2883, %v2604
        %v2885 = vadd.f32 %v2884, %v2605
        %v2886 = vadd.f32 %v2885, %v2606
        %v2887 = vadd.f32 %v2886, %v2607
        %v2888 = vadd.f32 %v2887, %v2608
        %v2889 = vadd.f32 %v2888, %v2609
        %v2890 = vadd.f32 %v2889, %v2610
        %v2891 = vadd.f32 %v2890, %v2611
        %v2892 = vadd.f32 %v2891, %v2612
        %v2893 = vadd.f32 %v2892, %v2613
        %v2894 = vadd.f32 %v2893, %v2614
        %v2895 = vadd.f32 %v2894, %v2615
        %v2896 = vadd.f32 %v2895, %v2616
        %v2897 = vadd.f32 %v2896, %v2617
        %v2898 = vrot.slane %v2897, 4
        %v2899 = vadd.f32 %v2897, %v2898
        %v2900 = vrot.slane %v2899, 2
        %v2901 = vadd.f32 %v2899, %v2900
        %v2902 = vrot.slane %v2901, 1
        %v2903 = vadd.f32 %v2901, %v2902
        %v2904 = vadd.f32 %v2618, %v2619
        %v2905 = vadd.f32 %v2904, %v2620
        %v2906 = vadd.f32 %v2905, %v2621
        %v2907 = vadd.f32 %v2906, %v2622
        %v2908 = vadd.f32 %v2907, %v2623
        %v2909 = vadd.f32 %v2908, %v2624
        %v2910 = vadd.f32 %v2909, %v2625
        %v2911 = vadd.f32 %v2910, %v2626
        %v2912 = vadd.f32 %v2911, %v2627
        %v2913 = vadd.f32 %v2912, %v2628
        %v2914 = vadd.f32 %v2913, %v2629
        %v2915 = vadd.f32 %v2914, %v2630
        %v2916 = vadd.f32 %v2915, %v2631
        %v2917 = vadd.f32 %v2916, %v2632
        %v2918 = vadd.f32 %v2917, %v2633
        %v2919 = vadd.f32 %v2918, %v2634
        %v2920 = vadd.f32 %v2919, %v2635
        %v2921 = vadd.f32 %v2920, %v2636
        %v2922 = vadd.f32 %v2921, %v2637
        %v2923 = vadd.f32 %v2922, %v2638
        %v2924 = vadd.f32 %v2923, %v2639
        %v2925 = vadd.f32 %v2924, %v2640
        %v2926 = vadd.f32 %v2925, %v2641
        %v2927 = vadd.f32 %v2926, %v2642
        %v2928 = vadd.f32 %v2927, %v2643
        %v2929 = vadd.f32 %v2928, %v2644
        %v2930 = vadd.f32 %v2929, %v2645
        %v2931 = vadd.f32 %v2930, %v2646
        %v2932 = vadd.f32 %v2931, %v2647
        %v2933 = vadd.f32 %v2932, %v2648
        %v2934 = vadd.f32 %v2933, %v2649
        %v2935 = vrot.slane %v2934, 4
        %v2936 = vadd.f32 %v2934, %v2935
        %v2937 = vrot.slane %v2936, 2
        %v2938 = vadd.f32 %v2936, %v2937
        %v2939 = vrot.slane %v2938, 1
        %v2940 = vadd.f32 %v2938, %v2939
        %v2941 = vadd.f32 %v2650, %v2651
        %v2942 = vadd.f32 %v2941, %v2652
        %v2943 = vadd.f32 %v2942, %v2653
        %v2944 = vadd.f32 %v2943, %v2654
        %v2945 = vadd.f32 %v2944, %v2655
        %v2946 = vadd.f32 %v2945, %v2656
        %v2947 = vadd.f32 %v2946, %v2657
        %v2948 = vadd.f32 %v2947, %v2658
        %v2949 = vadd.f32 %v2948, %v2659
        %v2950 = vadd.f32 %v2949, %v2660
        %v2951 = vadd.f32 %v2950, %v2661
        %v2952 = vadd.f32 %v2951, %v2662
        %v2953 = vadd.f32 %v2952, %v2663
        %v2954 = vadd.f32 %v2953, %v2664
        %v2955 = vadd.f32 %v2954, %v2665
        %v2956 = vadd.f32 %v2955, %v2666
        %v2957 = vadd.f32 %v2956, %v2667
        %v2958 = vadd.f32 %v2957, %v2668
        %v2959 = vadd.f32 %v2958, %v2669
        %v2960 = vadd.f32 %v2959, %v2670
        %v2961 = vadd.f32 %v2960, %v2671
        %v2962 = vadd.f32 %v2961, %v2672
        %v2963 = vadd.f32 %v2962, %v2673
        %v2964 = vadd.f32 %v2963, %v2674
        %v2965 = vadd.f32 %v2964, %v2675
        %v2966 = vadd.f32 %v2965, %v2676
        %v2967 = vadd.f32 %v2966, %v2677
        %v2968 = vadd.f32 %v2967, %v2678
        %v2969 = vadd.f32 %v2968, %v2679
        %v2970 = vadd.f32 %v2969, %v2680
        %v2971 = vadd.f32 %v2970, %v2681
        %v2972 = vrot.slane %v2971, 4
        %v2973 = vadd.f32 %v2971, %v2972
        %v2974 = vrot.slane %v2973, 2
        %v2975 = vadd.f32 %v2973, %v2974
        %v2976 = vrot.slane %v2975, 1
        %v2977 = vadd.f32 %v2975, %v2976
        %v2978 = vmul.f32 %v2718, 0.00390625
        %v2979 = vmul.f32 %v2755, 0.00390625
        %v2980 = vmul.f32 %v2792, 0.00390625
        %v2981 = vmul.f32 %v2829, 0.00390625
        %v2982 = vmul.f32 %v2866, 0.00390625
        %v2983 = vmul.f32 %v2903, 0.00390625
        %v2984 = vmul.f32 %v2940, 0.00390625
        %v2985 = vmul.f32 %v2977, 0.00390625
        %v2986 = vpack.c.bf16 %v2978, %v2978
        %v2987 = vpack.c.bf16 %v2979, %v2979
        %v2988 = vpack.c.bf16 %v2980, %v2980
        %v2989 = vpack.c.bf16 %v2981, %v2981
        %v2990 = vpack.c.bf16 %v2982, %v2982
        %v2991 = vpack.c.bf16 %v2983, %v2983
        %v2992 = vpack.c.bf16 %v2984, %v2984
        %v2993 = vpack.c.bf16 %v2985, %v2985
        %v2994 = vld [vmem:[#allocation7] sm:$0xf]
        %v2995 = vld [vmem:[#allocation7 + $0x4] sm:$0xf]
        %v2996 = vld [vmem:[#allocation7 + $0x8] sm:$0xf]
        %v2997 = vld [vmem:[#allocation7 + $0xc] sm:$0xf]
        %v2998 = vld [vmem:[#allocation7 + $0x10] sm:$0xf]
        %v2999 = vld [vmem:[#allocation7 + $0x14] sm:$0xf]
        %v3000 = vld [vmem:[#allocation7 + $0x18] sm:$0xf]
        %v3001 = vld [vmem:[#allocation7 + $0x1c] sm:$0xf]
        %v3002 = vld [vmem:[#allocation7 + $0x20] sm:$0xf]
        %v3003 = vld [vmem:[#allocation7 + $0x24] sm:$0xf]
        %v3004 = vld [vmem:[#allocation7 + $0x28] sm:$0xf]
        %v3005 = vld [vmem:[#allocation7 + $0x2c] sm:$0xf]
        %v3006 = vld [vmem:[#allocation7 + $0x30] sm:$0xf]
        %v3007 = vld [vmem:[#allocation7 + $0x34] sm:$0xf]
        %v3008 = vld [vmem:[#allocation7 + $0x38] sm:$0xf]
        %v3009 = vld [vmem:[#allocation7 + $0x3c] sm:$0xf]
        %v3010 = vld [vmem:[%s4] sm:$0x1]
        %v3012 = vlaneseq
        %v3013 = vshrl.u32 %v3012, 7
        %v3014 = vsub.s32 0, %v3013
        %v3015 = vrot.slane %v3010, %v3014
        %v3025 = vunpack.c.l.b16 %v2986
        %v3026 = vunpack.c.l.b16 %v2987
        %v3027 = vunpack.c.l.b16 %v2988
        %v3028 = vunpack.c.l.b16 %v2989
        %v3029 = vunpack.c.l.b16 %v2990
        %v3030 = vunpack.c.l.b16 %v2991
        %v3031 = vunpack.c.l.b16 %v2992
        %v3032 = vunpack.c.l.b16 %v2993
        %vm3033 = vcmask 1041409
        %v3034 = vsel %vm3033, %v3026, %v3025
        %vm3035 = vcmask 1042434
        %v3036 = vsel %vm3035, %v3027, %v3034
        %vm3037 = vcmask 1043459
        %v3038 = vsel %vm3037, %v3028, %v3036
        %vm3039 = vcmask 1044484
        %v3040 = vsel %vm3039, %v3029, %v3038
        %vm3041 = vcmask 1045509
        %v3042 = vsel %vm3041, %v3030, %v3040
        %vm3043 = vcmask 1046534
        %v3044 = vsel %vm3043, %v3031, %v3042
        %vm3045 = vcmask 1047559
        %v3046 = vsel %vm3045, %v3032, %v3044
        %v3047 = vpack.c.b16 %v3046, %v3046
        %v3065 = vunpack.c.l.b16 %v2994
        %v3066 = vunpack.c.l.b16 %v2995
        %v3067 = vunpack.c.l.b16 %v2996
        %v3068 = vunpack.c.l.b16 %v2997
        %v3069 = vunpack.c.l.b16 %v2998
        %v3070 = vunpack.c.l.b16 %v2999
        %v3071 = vunpack.c.l.b16 %v3000
        %v3072 = vunpack.c.l.b16 %v3001
        %v3073 = vunpack.c.l.b16 %v3002
        %v3074 = vunpack.c.l.b16 %v3003
        %v3075 = vunpack.c.l.b16 %v3004
        %v3076 = vunpack.c.l.b16 %v3005
        %v3077 = vunpack.c.l.b16 %v3006
        %v3078 = vunpack.c.l.b16 %v3007
        %v3079 = vunpack.c.l.b16 %v3008
        %v3080 = vunpack.c.l.b16 %v3009
        %v3081 = vpack.c.b16 %v3066, %v3065
        %v3082 = vpack.c.b16 %v3068, %v3067
        %v3083 = vpack.c.b16 %v3070, %v3069
        %v3084 = vpack.c.b16 %v3072, %v3071
        %v3085 = vpack.c.b16 %v3074, %v3073
        %v3086 = vpack.c.b16 %v3076, %v3075
        %v3087 = vpack.c.b16 %v3078, %v3077
        %v3088 = vpack.c.b16 %v3080, %v3079
        %3097 = vmatprep.subr.bf16.mxu0 0
        %3098 = vmatpush1.bf16.msra.mxu0 %v3081
        %3099 = vmatprep.subr.bf16.mxu0 0
        %3100 = vmatpush1.bf16.msra.mxu0 %v3082
        %3101 = vmatprep.subr.bf16.mxu0 0
        %3102 = vmatpush1.bf16.msra.mxu0 %v3083
        %3103 = vmatprep.subr.bf16.mxu0 0
        %3104 = vmatpush1.bf16.msra.mxu0 %v3084
        %3105 = vmatprep.subr.bf16.mxu0 0
        %3106 = vmatpush1.bf16.msra.mxu0 %v3085
        %3107 = vmatprep.subr.bf16.mxu0 0
        %3108 = vmatpush1.bf16.msra.mxu0 %v3086
        %3109 = vmatprep.subr.bf16.mxu0 0
        %3110 = vmatpush1.bf16.msra.mxu0 %v3087
        %3111 = vmatprep.subr.bf16.mxu0 0
        %3112 = vmatpush1.bf16.msra.mxu0 %v3088
        %3113 = vmatprep.subr.bf16.mxu0 0
        %3114 = vmatpush1.bf16.msra.mxu0 0
        %3115 = vmatprep.subr.bf16.mxu0 0
        %3116 = vmatpush1.bf16.msra.mxu0 0
        %3117 = vmatprep.subr.bf16.mxu0 0
        %3118 = vmatpush1.bf16.msra.mxu0 0
        %3119 = vmatprep.subr.bf16.mxu0 0
        %3120 = vmatpush1.bf16.msra.mxu0 0
        %3121 = vmatprep.subr.bf16.mxu0 0
        %3122 = vmatpush1.bf16.msra.mxu0 0
        %3123 = vmatprep.subr.bf16.mxu0 0
        %3124 = vmatpush1.bf16.msra.mxu0 0
        %3125 = vmatprep.subr.bf16.mxu0 0
        %3126 = vmatpush1.bf16.msra.mxu0 0
        %3127 = vmatprep.subr.bf16.mxu0 0
        %3128 = vmatpush1.bf16.msra.mxu0 0
        %3129 = vmatprep.mubr.bf16.mxu0 0
        %3130 = vmatmul.mubr.bf16.gmra.mrb[0].mxu0 %v3047
        %v3131 = vpop.f32.mrb[0].mxu0
        %v3132 = vadd.f32 %v3015, %v3131
        %v3133 = vpop.f32.mrb[0].mxu0
        %v3134 = vpop.f32.mrb[0].mxu0
        %v3135 = vpop.f32.mrb[0].mxu0
        %3136 = vdwg.mxu0
        %v3137 = vmul.f32 %v3132, %v3132
        %3138 = vadd.xlane.f32.xlu0 %v3137
        %v3139 = vpop.xlane.xlu0 %3138
        %v3140 = vmax.f32 %v3139, 1e-24
        %v3141 = vrsqrt.pop %v3140
        %v3142 = vmul.f32 %v3132, %v3141
        %3143 = vst [vmem:[%s271] sm:$0xff] %v3142
        %s3144 = sand.u32 %s141, 1
        %s3145 = scalar_lea.sflag [#allocation4], %s3144
        %s3146 = sand.u32 %s141, 1
        %s3147 = smul.addr %s3146, 8
        %s3148 = scalar_lea.vmem [#allocation8], %s3147
        // Predicated region
        $region53: #{tpu_custom_call.1} parent=39 // pred_check
          %p3149 = pneg %p151
        $region54: #{tpu_custom_call.1} parent=39 // pred_check_branch
          %3151 = sbr.rel (%p3149) target = $region56
        $region55: #{tpu_custom_call.1} parent=39 // pred_region
          %s3153 = ssub.s32 128, 128
          %3154 = vsyncadd %s3145, %s3153
          %s3155 = smul.addr %s23, 128
          %s3156 = scalar_lea.hbm %s5, %s3155
          %s3158 = sshll.u32 %s3148, 4
          %s3159 = int_to_ptr.vmem [resolvable:$true] %s3158
          %3161 = dma.vmem_to_hbm [thread:$0]  %s3159, 128, %s3156, %s3145
        $region56: #{tpu_custom_call.1} parent=39 // pred_fallthru
          _
      $region40: #{tpu_custom_call.1} parent=5 // pred_fallthru
        _
      %p3162 = scmp.le.s32.totalorder 2, %s18
      // Predicated region
      $region57: #{tpu_custom_call.1} parent=5 // pred_check
        %p3163 = pneg %p3162
      $region58: #{tpu_custom_call.1} parent=5 // pred_check_branch
        %3165 = sbr.rel (%p3163) target = $region60
      $region59: #{tpu_custom_call.1} parent=5 // pred_region
        %s3166 = ssub.s32 %s18, 2
        // Predicated region
        $region61: #{tpu_custom_call.1} parent=59 // pred_check
          %p3167 = pneg %p157
        $region62: #{tpu_custom_call.1} parent=59 // pred_check_branch
          %3169 = sbr.rel (%p3167) target = $region64
        $region63: #{tpu_custom_call.1} parent=59 // pred_region
          %s3170 = sand.u32 %s142, 1
          %s3171 = scalar_lea.sflag [#allocation4], %s3170
          %s3172 = sand.u32 %s142, 1
          %s3173 = smul.addr %s3172, 8
          %s3174 = scalar_lea.vmem [#allocation8], %s3173
          %3175 = dma.done %s3171, 128
        $region64: #{tpu_custom_call.1} parent=59 // pred_fallthru
          _
      $region60: #{tpu_custom_call.1} parent=5 // pred_fallthru
        _
    $region6: #{tpu_custom_call.1} parent=1 // loop_footer
      %s22 = sadd.s32 1, %s18
    $region7: #{tpu_custom_call.1} parent=1 // loop_footer_branch
      %17 = sbr.rel target = $region3
    $region8: #{tpu_custom_call.1} parent=1 // loop_exit
      _
    %3176 = vsyncpa [#allocation3], 1
    %s3177 = scalar_lea.sflag [#allocation3], 1
    %3178 = vsyncpa %s3177, 1
    %3179 = vsyncpa [#allocation6], 1
    %3180 = vsyncpa [#allocation4], 1
    %s3181 = scalar_lea.sflag [#allocation4], 1
    %3182 = vsyncpa %s3181, 1

</llo_original>
